<compile_context>
chip_gen: v5e
topology: v5e:2x2
jax: 0.10.0
libtpu: 0.0.40
codegen_flags: <defaults>
</compile_context>

<pallas_src>
import functools

import jax
import jax.numpy as jnp
import numpy as np
from jax.experimental import pallas as pl
from jax.experimental.pallas import tpu as pltpu


def ream_kernel(x_ref, mask_ref, w1_ref, w2_ref, pmat_ref, bmat_ref,
                wd1_ref, bd1_ref, wd2_ref, bd2_ref, alpha_ref, out_ref, *, W):
    # x_ref    : (1, Cin, L)    L = Nb*H*W, f32; Nb images packed on lanes
    # mask_ref : (9, L)         border masks (per-image), compute dtype
    # w1_ref   : (Cmid, 9*Cin)  conv1 weights, columns ordered (kh, kw, cin)
    # w2_ref   : (Cout, 9*Cmid) conv2 weights, columns ordered (kh, kw, cmid)
    # pmat_ref : (L, Nb)        per-image avg-pool selector (1/HW on own image)
    # bmat_ref : (Nb, L)        per-image broadcast selector (1 on own image)
    # wd1_ref  : (Cr, Cout), bd1_ref: (Cr, 1)    CA squeeze (pre-transposed)
    # wd2_ref  : (Cout, Cr), bd2_ref: (Cout, 1)  CA excite  (pre-transposed)
    # alpha_ref: (1,) in SMEM   PReLU shared slope
    # out_ref  : (1, Cout, L)
    cdt = w1_ref.dtype                       # MXU compute dtype (bf16 or f32)
    L = x_ref.shape[2]

    x = x_ref[0]                             # (Cin, L), f32 (kept for residual)
    m_all = mask_ref[...]                    # (9, L), cdt

    def im2col(a):
        # a: (C, L) in cdt -> (9*C, L); row blocks ordered (kh, kw), channels
        # inside, matching the (kh, kw, c) column order of the reshaped weights.
        parts = []
        k = 0
        for dh in (-1, 0, 1):
            for dw in (-1, 0, 1):
                off = dh * W + dw
                if off == 0:                 # center tap: no shift, no mask
                    parts.append(a)
                else:
                    t = pltpu.roll(a, (-off) % L, axis=1)   # XLU vrot, off VALU
                    parts.append(t * m_all[k:k + 1, :])
                k += 1
        return jnp.concatenate(parts, axis=0)

    # ---- conv1: 3x3, pad 1, no bias — one fused K = 9*Cin matmul (bf16 MXU) ----
    z1 = jnp.dot(w1_ref[...], im2col(x.astype(cdt)),
                 preferred_element_type=jnp.float32)        # (Cmid, L) f32

    # ---- PReLU (single shared slope, torch nn.PReLU() default), f32 ----
    alpha = alpha_ref[0]
    y1 = jnp.where(z1 > 0, z1, alpha * z1)

    # ---- conv2: 3x3, pad 1, no bias — one fused K = 9*Cmid matmul ----
    z2 = jnp.dot(w2_ref[...], im2col(y1.astype(cdt)),
                 preferred_element_type=jnp.float32)        # (Cout, L) f32

    # ---- REA channel attention (squeeze-excite, see TODO at top), f32 ----
    # Per-image avg pool / broadcast via tiny selector matmuls -> lane width Nb,
    # no 1-lane MXU columns and no in-kernel lane-axis reshapes.
    pool = jnp.dot(z2, pmat_ref[...], preferred_element_type=jnp.float32)  # (Cout, Nb)
    h = jnp.maximum(
        jnp.dot(wd1_ref[...], pool, preferred_element_type=jnp.float32)
        + bd1_ref[...], 0.0)                                               # (Cr, Nb)
    s = jax.nn.sigmoid(
        jnp.dot(wd2_ref[...], h, preferred_element_type=jnp.float32)
        + bd2_ref[...])                                                    # (Cout, Nb)
    s_full = jnp.dot(s, bmat_ref[...], preferred_element_type=jnp.float32) # (Cout, L)

    # ---- scale + residual (reuses already-loaded x; requires Cin == Cout) ----
    out_ref[0] = (z2 * s_full + x).astype(out_ref.dtype)


def _pick_nb(n, nb_max):
    """Largest per-step batch pack Nb dividing N that still leaves >=2 grid steps."""
    best = 1
    for nb in range(1, min(n, nb_max) + 1):
        if n % nb == 0 and n // nb >= 2:
            best = nb
    return best


def ream_forward(x_nchw, params, *, compute_dtype=jnp.bfloat16, nb_max=8):
    """x_nchw: (N, Cin, H, W) float32 (torch layout). Returns (N, Cout, H, W)."""
    w1, alpha, w2, wd1, bd1, wd2, bd2 = params
    N, Cin, H, W = x_nchw.shape
    Cmid = w1.shape[0]
    Cout = w2.shape[0]
    Cr = wd1.shape[1]
    assert Cin == Cout, "REAM residual add requires in_channels == out_channels"
    HW = H * W

    Nb = _pick_nb(N, nb_max)          # images packed per grid step (lane axis)
    G = N // Nb                       # grid steps (parallel -> megacore on v7x)
    L = Nb * HW

    # torch conv weight (Co, Ci, kh, kw) -> (Co, kh, kw, Ci) -> (Co, 9*Ci), bf16.
    w1r = jnp.transpose(w1, (0, 2, 3, 1)).reshape(Cmid, 9 * Cin).astype(compute_dtype)
    w2r = jnp.transpose(w2, (0, 2, 3, 1)).reshape(Cout, 9 * Cmid).astype(compute_dtype)
    wd1t = wd1.T                                  # (Cr, Cout)
    bd1t = bd1.reshape(Cr, 1)
    wd2t = wd2.T                                  # (Cout, Cr)
    bd2t = bd2.reshape(Cout, 1)
    alpha1 = jnp.reshape(alpha, (1,)).astype(jnp.float32)

    # ---- precompute per-lane helpers once (numpy, constant inputs) ----
    lane = np.arange(L)
    p = lane % HW                      # per-image flat index (no cross-image bleed)
    row, col = p // W, p % W
    img = lane // HW
    masks = np.ones((9, L), np.float32)
    k = 0
    for dh in (-1, 0, 1):
        for dw in (-1, 0, 1):
            m = np.ones(L, bool)
            if dh == -1:
                m &= row >= 1
            if dh == 1:
                m &= row <= H - 2
            if dw == -1:
                m &= col >= 1
            if dw == 1:
                m &= col <= W - 2
            masks[k] = m
            k += 1
    masks = jnp.asarray(masks, compute_dtype)
    pmat = jnp.asarray((img[:, None] == np.arange(Nb)[None, :]).astype(np.float32) / HW)
    bmat = jnp.asarray((np.arange(Nb)[:, None] == img[None, :]).astype(np.float32))

    # pack Nb images onto the lane axis: (N,Cin,H,W) -> (G, Cin, Nb*HW)
    x_flat = x_nchw.reshape(G, Nb, Cin, HW).transpose(0, 2, 1, 3).reshape(G, Cin, L)

    kernel = functools.partial(ream_kernel, W=W)

    flops = 2 * N * HW * 9 * (Cin * Cmid + Cmid * Cout) + 4 * N * HW * Cout
    bytes_accessed = (4 * N * HW * (Cin + Cout)
                      + w1r.size * w1r.dtype.itemsize
                      + w2r.size * w2r.dtype.itemsize
                      + 4 * (wd1.size + wd2.size + bd1.size + bd2.size))

    out = pl.pallas_call(
        kernel,
        grid=(G,),
        in_specs=[
            pl.BlockSpec((1, Cin, L), lambda g: (g, 0, 0)),
            pl.BlockSpec((9, L), lambda g: (0, 0)),
            pl.BlockSpec((Cmid, 9 * Cin), lambda g: (0, 0)),
            pl.BlockSpec((Cout, 9 * Cmid), lambda g: (0, 0)),
            pl.BlockSpec((L, Nb), lambda g: (0, 0)),
            pl.BlockSpec((Nb, L), lambda g: (0, 0)),
            pl.BlockSpec((Cr, Cout), lambda g: (0, 0)),
            pl.BlockSpec((Cr, 1), lambda g: (0, 0)),
            pl.BlockSpec((Cout, Cr), lambda g: (0, 0)),
            pl.BlockSpec((Cout, 1), lambda g: (0, 0)),
            pl.BlockSpec(memory_space=pltpu.MemorySpace.SMEM),   # PReLU alpha scalar
        ],
        out_specs=pl.BlockSpec((1, Cout, L), lambda g: (g, 0, 0)),
        out_shape=jax.ShapeDtypeStruct((G, Cout, L), jnp.float32),
        compiler_params=pltpu.CompilerParams(
            dimension_semantics=("parallel",),       # independent batch groups
            vmem_limit_bytes=32 * 1024 * 1024),      # explicit (v5e default is 16 MiB)
        cost_estimate=pl.CostEstimate(
            flops=int(flops),
            transcendentals=int(N * Cout),
            bytes_accessed=int(bytes_accessed)),
    )(x_flat, masks, w1r, w2r, pmat, bmat, wd1t, bd1t, wd2t, bd2t, alpha1)

    # unpack: (G, Cout, Nb*HW) -> (N, Cout, H, W)
    return out.reshape(G, Cout, Nb, HW).transpose(0, 2, 1, 3).reshape(N, Cout, H, W)


def ream_reference(x_nchw, params):
    """Pure-JAX f32 reference (same math, no Pallas) for verification."""
    w1, alpha, w2, wd1, bd1, wd2, bd2 = params
    dn = ('NCHW', 'OIHW', 'NCHW')
    y1 = jax.lax.conv_general_dilated(x_nchw, w1, (1, 1), 'SAME',
                                      dimension_numbers=dn)
    y1 = jnp.where(y1 > 0, y1, alpha * y1)
    y2 = jax.lax.conv_general_dilated(y1, w2, (1, 1), 'SAME',
                                      dimension_numbers=dn)
    pool = y2.mean(axis=(2, 3))                            # (N, Cout)
    h = jnp.maximum(pool @ wd1 + bd1, 0.0)                 # (N, Cr)
    s = jax.nn.sigmoid(h @ wd2 + bd2)                      # (N, Cout)
    return y2 * s[:, :, None, None] + x_nchw


def make_params(key, in_channels, mid_channels, out_channels, reduction=4):
    ks = jax.random.split(key, 6)
    cr = max(out_channels // reduction, 1)
    w1 = 0.1 * jax.random.normal(ks[0], (mid_channels, in_channels, 3, 3), jnp.float32)
    w2 = 0.1 * jax.random.normal(ks[1], (out_channels, mid_channels, 3, 3), jnp.float32)
    alpha = jnp.float32(0.25)                              # torch nn.PReLU() default
    wd1 = 0.1 * jax.random.normal(ks[2], (out_channels, cr), jnp.float32)
    bd1 = 0.01 * jax.random.normal(ks[3], (1, cr), jnp.float32)
    wd2 = 0.1 * jax.random.normal(ks[4], (cr, out_channels), jnp.float32)
    bd2 = 0.01 * jax.random.normal(ks[5], (1, out_channels), jnp.float32)
    return (w1, alpha, w2, wd1, bd1, wd2, bd2)


if __name__ == "__main__":
    key = jax.random.PRNGKey(0)
    kx, kp = jax.random.split(key)

    # Small shapes: batch=4 (packed 2-per-step, 2 parallel grid steps),
    # in=out channels=8, mid channels=16, spatial 16x16.
    N, H, W = 4, 16, 16
    Cin, Cmid, Cout = 8, 16, 8                             # residual needs Cin == Cout

    x = jax.random.normal(kx, (N, Cin, H, W), jnp.float32)  # NCHW, torch layout
    params = make_params(kp, Cin, Cmid, Cout)

    ref = ream_reference(x, params)

    # f32 compute path: tight check of kernel structure / masks / attention math.
    out_f32 = jax.block_until_ready(ream_forward(x, params, compute_dtype=jnp.float32))
    np.testing.assert_allclose(np.asarray(out_f32), np.asarray(ref),
                               rtol=1e-4, atol=1e-4)

    # bf16 MXU path (default, f32 accumulation): loose tolerance vs f32 reference.
    out_bf16 = jax.block_until_ready(ream_forward(x, params))
    np.testing.assert_allclose(np.asarray(out_bf16), np.asarray(ref),
                               rtol=5e-2, atol=5e-2)

    print("KERNEL_OK")
</pallas_src>

<mosaic_0001>
module attributes {stable_mosaic.version = 11 : i64} {
  func.func @ream_kernel(%arg0: i32, %arg1: memref<1x8x512xf32, #tpu.memory_space<vmem>>, %arg2: memref<9x512xf32, #tpu.memory_space<vmem>>, %arg3: memref<16x72xf32, #tpu.memory_space<vmem>>, %arg4: memref<8x144xf32, #tpu.memory_space<vmem>>, %arg5: memref<512x2xf32, #tpu.memory_space<vmem>>, %arg6: memref<2x512xf32, #tpu.memory_space<vmem>>, %arg7: memref<2x8xf32, #tpu.memory_space<vmem>>, %arg8: memref<2x1xf32, #tpu.memory_space<vmem>>, %arg9: memref<8x2xf32, #tpu.memory_space<vmem>>, %arg10: memref<8x1xf32, #tpu.memory_space<vmem>>, %arg11: memref<1xf32, #tpu.memory_space<smem>>, %arg12: memref<1x8x512xf32, #tpu.memory_space<vmem>>) attributes {dimension_semantics = [#tpu.dimension_semantics<parallel>], iteration_bounds = array<i64: 2>, scalar_prefetch = 0 : i64, scratch_operands = 0 : i64, tpu.core_type = #tpu.core_type<tc>, window_params = [{transform_indices = @transform_0, window_bounds = array<i64: 1, 8, 512>}, {pipeline_mode = #tpu.pipeline_mode<synchronous>, transform_indices = @transform_1, window_bounds = array<i64: 9, 512>}, {pipeline_mode = #tpu.pipeline_mode<synchronous>, transform_indices = @transform_2, window_bounds = array<i64: 16, 72>}, {pipeline_mode = #tpu.pipeline_mode<synchronous>, transform_indices = @transform_3, window_bounds = array<i64: 8, 144>}, {pipeline_mode = #tpu.pipeline_mode<synchronous>, transform_indices = @transform_4, window_bounds = array<i64: 512, 2>}, {pipeline_mode = #tpu.pipeline_mode<synchronous>, transform_indices = @transform_5, window_bounds = array<i64: 2, 512>}, {pipeline_mode = #tpu.pipeline_mode<synchronous>, transform_indices = @transform_6, window_bounds = array<i64: 2, 8>}, {pipeline_mode = #tpu.pipeline_mode<synchronous>, transform_indices = @transform_7, window_bounds = array<i64: 2, 1>}, {pipeline_mode = #tpu.pipeline_mode<synchronous>, transform_indices = @transform_8, window_bounds = array<i64: 8, 2>}, {pipeline_mode = #tpu.pipeline_mode<synchronous>, transform_indices = @transform_9, window_bounds = array<i64: 8, 1>}, {transform_indices = @transform_10, window_bounds = array<i64: 1>}, {transform_indices = @transform_11, window_bounds = array<i64: 1, 8, 512>}]} {
    %c0 = arith.constant 0 : index
    %c0_0 = arith.constant 0 : index
    %c0_1 = arith.constant 0 : index
    %0 = vector.load %arg1[%c0, %c0_0, %c0_1] : memref<1x8x512xf32, #tpu.memory_space<vmem>>, vector<1x8x512xf32>
    %1 = vector.shape_cast %0 : vector<1x8x512xf32> to vector<8x512xf32>
    %c0_2 = arith.constant 0 : index
    %c0_3 = arith.constant 0 : index
    %2 = vector.load %arg2[%c0_2, %c0_3] : memref<9x512xf32, #tpu.memory_space<vmem>>, vector<9x512xf32>
    %c0_4 = arith.constant 0 : index
    %c0_5 = arith.constant 0 : index
    %3 = vector.load %arg3[%c0_4, %c0_5] : memref<16x72xf32, #tpu.memory_space<vmem>>, vector<16x72xf32>
    %c17_i32 = arith.constant 17 : i32
    %4 = tpu.dynamic_rotate %1 by %c17_i32 dim 1 : vector<8x512xf32>, i32 -> vector<8x512xf32>
    %5 = vector.extract_strided_slice %2 {offsets = [0, 0], sizes = [1, 512], strides = [1, 1]} : vector<9x512xf32> to vector<1x512xf32>
    %6 = vector.broadcast %5 : vector<1x512xf32> to vector<8x512xf32>
    %7 = arith.mulf %4, %6 : vector<8x512xf32>
    %c16_i32 = arith.constant 16 : i32
    %8 = tpu.dynamic_rotate %1 by %c16_i32 dim 1 : vector<8x512xf32>, i32 -> vector<8x512xf32>
    %9 = vector.extract_strided_slice %2 {offsets = [1, 0], sizes = [1, 512], strides = [1, 1]} : vector<9x512xf32> to vector<1x512xf32>
    %10 = vector.broadcast %9 : vector<1x512xf32> to vector<8x512xf32>
    %11 = arith.mulf %8, %10 : vector<8x512xf32>
    %c15_i32 = arith.constant 15 : i32
    %12 = tpu.dynamic_rotate %1 by %c15_i32 dim 1 : vector<8x512xf32>, i32 -> vector<8x512xf32>
    %13 = vector.extract_strided_slice %2 {offsets = [2, 0], sizes = [1, 512], strides = [1, 1]} : vector<9x512xf32> to vector<1x512xf32>
    %14 = vector.broadcast %13 : vector<1x512xf32> to vector<8x512xf32>
    %15 = arith.mulf %12, %14 : vector<8x512xf32>
    %c1_i32 = arith.constant 1 : i32
    %16 = tpu.dynamic_rotate %1 by %c1_i32 dim 1 : vector<8x512xf32>, i32 -> vector<8x512xf32>
    %17 = vector.extract_strided_slice %2 {offsets = [3, 0], sizes = [1, 512], strides = [1, 1]} : vector<9x512xf32> to vector<1x512xf32>
    %18 = vector.broadcast %17 : vector<1x512xf32> to vector<8x512xf32>
    %19 = arith.mulf %16, %18 : vector<8x512xf32>
    %c511_i32 = arith.constant 511 : i32
    %20 = tpu.dynamic_rotate %1 by %c511_i32 dim 1 : vector<8x512xf32>, i32 -> vector<8x512xf32>
    %21 = vector.extract_strided_slice %2 {offsets = [5, 0], sizes = [1, 512], strides = [1, 1]} : vector<9x512xf32> to vector<1x512xf32>
    %22 = vector.broadcast %21 : vector<1x512xf32> to vector<8x512xf32>
    %23 = arith.mulf %20, %22 : vector<8x512xf32>
    %c497_i32 = arith.constant 497 : i32
    %24 = tpu.dynamic_rotate %1 by %c497_i32 dim 1 : vector<8x512xf32>, i32 -> vector<8x512xf32>
    %25 = vector.extract_strided_slice %2 {offsets = [6, 0], sizes = [1, 512], strides = [1, 1]} : vector<9x512xf32> to vector<1x512xf32>
    %26 = vector.broadcast %25 : vector<1x512xf32> to vector<8x512xf32>
    %27 = arith.mulf %24, %26 : vector<8x512xf32>
    %c496_i32 = arith.constant 496 : i32
    %28 = tpu.dynamic_rotate %1 by %c496_i32 dim 1 : vector<8x512xf32>, i32 -> vector<8x512xf32>
    %29 = vector.extract_strided_slice %2 {offsets = [7, 0], sizes = [1, 512], strides = [1, 1]} : vector<9x512xf32> to vector<1x512xf32>
    %30 = vector.broadcast %29 : vector<1x512xf32> to vector<8x512xf32>
    %31 = arith.mulf %28, %30 : vector<8x512xf32>
    %c495_i32 = arith.constant 495 : i32
    %32 = tpu.dynamic_rotate %1 by %c495_i32 dim 1 : vector<8x512xf32>, i32 -> vector<8x512xf32>
    %33 = vector.extract_strided_slice %2 {offsets = [8, 0], sizes = [1, 512], strides = [1, 1]} : vector<9x512xf32> to vector<1x512xf32>
    %34 = vector.broadcast %33 : vector<1x512xf32> to vector<8x512xf32>
    %35 = arith.mulf %32, %34 : vector<8x512xf32>
    %36 = tpu.concatenate %7, %11, %15, %19, %1, %23, %27, %31, %35 in 0 : vector<8x512xf32>, vector<8x512xf32>, vector<8x512xf32>, vector<8x512xf32>, vector<8x512xf32>, vector<8x512xf32>, vector<8x512xf32>, vector<8x512xf32>, vector<8x512xf32> -> vector<72x512xf32>
    %cst = arith.constant dense<0.000000e+00> : vector<16x512xf32>
    %37 = tpu.matmul %3, %36, %cst {dimension_numbers = #tpu.dot_dimension_numbers<[1], [0], [0], [1], [0, 0, 1, 1], [], []>} : vector<16x72xf32>, vector<72x512xf32>, vector<16x512xf32> -> vector<16x512xf32>
    %c0_6 = arith.constant 0 : index
    %38 = memref.load %arg11[%c0_6] : memref<1xf32, #tpu.memory_space<smem>>
    %cst_7 = arith.constant 0.000000e+00 : f32
    %39 = vector.broadcast %cst_7 : f32 to vector<16x512xf32>
    %40 = arith.cmpf ogt, %37, %39 : vector<16x512xf32>
    %41 = vector.broadcast %38 : f32 to vector<16x512xf32>
    %42 = arith.mulf %41, %37 : vector<16x512xf32>
    %43 = arith.select %40, %37, %42 : vector<16x512xi1>, vector<16x512xf32>
    %c0_8 = arith.constant 0 : index
    %c0_9 = arith.constant 0 : index
    %44 = vector.load %arg4[%c0_8, %c0_9] : memref<8x144xf32, #tpu.memory_space<vmem>>, vector<8x144xf32>
    %c17_i32_10 = arith.constant 17 : i32
    %45 = tpu.dynamic_rotate %43 by %c17_i32_10 dim 1 : vector<16x512xf32>, i32 -> vector<16x512xf32>
    %46 = vector.extract_strided_slice %2 {offsets = [0, 0], sizes = [1, 512], strides = [1, 1]} : vector<9x512xf32> to vector<1x512xf32>
    %47 = vector.broadcast %46 : vector<1x512xf32> to vector<16x512xf32>
    %48 = arith.mulf %45, %47 : vector<16x512xf32>
    %c16_i32_11 = arith.constant 16 : i32
    %49 = tpu.dynamic_rotate %43 by %c16_i32_11 dim 1 : vector<16x512xf32>, i32 -> vector<16x512xf32>
    %50 = vector.extract_strided_slice %2 {offsets = [1, 0], sizes = [1, 512], strides = [1, 1]} : vector<9x512xf32> to vector<1x512xf32>
    %51 = vector.broadcast %50 : vector<1x512xf32> to vector<16x512xf32>
    %52 = arith.mulf %49, %51 : vector<16x512xf32>
    %c15_i32_12 = arith.constant 15 : i32
    %53 = tpu.dynamic_rotate %43 by %c15_i32_12 dim 1 : vector<16x512xf32>, i32 -> vector<16x512xf32>
    %54 = vector.extract_strided_slice %2 {offsets = [2, 0], sizes = [1, 512], strides = [1, 1]} : vector<9x512xf32> to vector<1x512xf32>
    %55 = vector.broadcast %54 : vector<1x512xf32> to vector<16x512xf32>
    %56 = arith.mulf %53, %55 : vector<16x512xf32>
    %c1_i32_13 = arith.constant 1 : i32
    %57 = tpu.dynamic_rotate %43 by %c1_i32_13 dim 1 : vector<16x512xf32>, i32 -> vector<16x512xf32>
    %58 = vector.extract_strided_slice %2 {offsets = [3, 0], sizes = [1, 512], strides = [1, 1]} : vector<9x512xf32> to vector<1x512xf32>
    %59 = vector.broadcast %58 : vector<1x512xf32> to vector<16x512xf32>
    %60 = arith.mulf %57, %59 : vector<16x512xf32>
    %c511_i32_14 = arith.constant 511 : i32
    %61 = tpu.dynamic_rotate %43 by %c511_i32_14 dim 1 : vector<16x512xf32>, i32 -> vector<16x512xf32>
    %62 = vector.extract_strided_slice %2 {offsets = [5, 0], sizes = [1, 512], strides = [1, 1]} : vector<9x512xf32> to vector<1x512xf32>
    %63 = vector.broadcast %62 : vector<1x512xf32> to vector<16x512xf32>
    %64 = arith.mulf %61, %63 : vector<16x512xf32>
    %c497_i32_15 = arith.constant 497 : i32
    %65 = tpu.dynamic_rotate %43 by %c497_i32_15 dim 1 : vector<16x512xf32>, i32 -> vector<16x512xf32>
    %66 = vector.extract_strided_slice %2 {offsets = [6, 0], sizes = [1, 512], strides = [1, 1]} : vector<9x512xf32> to vector<1x512xf32>
    %67 = vector.broadcast %66 : vector<1x512xf32> to vector<16x512xf32>
    %68 = arith.mulf %65, %67 : vector<16x512xf32>
    %c496_i32_16 = arith.constant 496 : i32
    %69 = tpu.dynamic_rotate %43 by %c496_i32_16 dim 1 : vector<16x512xf32>, i32 -> vector<16x512xf32>
    %70 = vector.extract_strided_slice %2 {offsets = [7, 0], sizes = [1, 512], strides = [1, 1]} : vector<9x512xf32> to vector<1x512xf32>
    %71 = vector.broadcast %70 : vector<1x512xf32> to vector<16x512xf32>
    %72 = arith.mulf %69, %71 : vector<16x512xf32>
    %c495_i32_17 = arith.constant 495 : i32
    %73 = tpu.dynamic_rotate %43 by %c495_i32_17 dim 1 : vector<16x512xf32>, i32 -> vector<16x512xf32>
    %74 = vector.extract_strided_slice %2 {offsets = [8, 0], sizes = [1, 512], strides = [1, 1]} : vector<9x512xf32> to vector<1x512xf32>
    %75 = vector.broadcast %74 : vector<1x512xf32> to vector<16x512xf32>
    %76 = arith.mulf %73, %75 : vector<16x512xf32>
    %77 = tpu.concatenate %48, %52, %56, %60, %43, %64, %68, %72, %76 in 0 : vector<16x512xf32>, vector<16x512xf32>, vector<16x512xf32>, vector<16x512xf32>, vector<16x512xf32>, vector<16x512xf32>, vector<16x512xf32>, vector<16x512xf32>, vector<16x512xf32> -> vector<144x512xf32>
    %cst_18 = arith.constant dense<0.000000e+00> : vector<8x512xf32>
    %78 = tpu.matmul %44, %77, %cst_18 {dimension_numbers = #tpu.dot_dimension_numbers<[1], [0], [0], [1], [0, 0, 1, 1], [], []>} : vector<8x144xf32>, vector<144x512xf32>, vector<8x512xf32> -> vector<8x512xf32>
    %c0_19 = arith.constant 0 : index
    %c0_20 = arith.constant 0 : index
    %79 = vector.load %arg5[%c0_19, %c0_20] : memref<512x2xf32, #tpu.memory_space<vmem>>, vector<512x2xf32>
    %cst_21 = arith.constant dense<0.000000e+00> : vector<8x2xf32>
    %80 = tpu.matmul %78, %79, %cst_21 {dimension_numbers = #tpu.dot_dimension_numbers<[1], [0], [0], [1], [0, 0, 1, 1], [], []>} : vector<8x512xf32>, vector<512x2xf32>, vector<8x2xf32> -> vector<8x2xf32>
    %c0_22 = arith.constant 0 : index
    %c0_23 = arith.constant 0 : index
    %81 = vector.load %arg7[%c0_22, %c0_23] : memref<2x8xf32, #tpu.memory_space<vmem>>, vector<2x8xf32>
    %cst_24 = arith.constant dense<0.000000e+00> : vector<2x2xf32>
    %82 = tpu.matmul %81, %80, %cst_24 {dimension_numbers = #tpu.dot_dimension_numbers<[1], [0], [0], [1], [0, 0, 1, 1], [], []>} : vector<2x8xf32>, vector<8x2xf32>, vector<2x2xf32> -> vector<2x2xf32>
    %c0_25 = arith.constant 0 : index
    %c0_26 = arith.constant 0 : index
    %83 = vector.load %arg8[%c0_25, %c0_26] : memref<2x1xf32, #tpu.memory_space<vmem>>, vector<2x1xf32>
    %84 = vector.broadcast %83 : vector<2x1xf32> to vector<2x2xf32>
    %85 = arith.addf %82, %84 : vector<2x2xf32>
    %cst_27 = arith.constant 0.000000e+00 : f32
    %86 = vector.broadcast %cst_27 : f32 to vector<2x2xf32>
    %87 = arith.maximumf %85, %86 : vector<2x2xf32>
    %c0_28 = arith.constant 0 : index
    %c0_29 = arith.constant 0 : index
    %88 = vector.load %arg9[%c0_28, %c0_29] : memref<8x2xf32, #tpu.memory_space<vmem>>, vector<8x2xf32>
    %cst_30 = arith.constant dense<0.000000e+00> : vector<8x2xf32>
    %89 = tpu.matmul %88, %87, %cst_30 {dimension_numbers = #tpu.dot_dimension_numbers<[1], [0], [0], [1], [0, 0, 1, 1], [], []>} : vector<8x2xf32>, vector<2x2xf32>, vector<8x2xf32> -> vector<8x2xf32>
    %c0_31 = arith.constant 0 : index
    %c0_32 = arith.constant 0 : index
    %90 = vector.load %arg10[%c0_31, %c0_32] : memref<8x1xf32, #tpu.memory_space<vmem>>, vector<8x1xf32>
    %91 = vector.broadcast %90 : vector<8x1xf32> to vector<8x2xf32>
    %92 = arith.addf %89, %91 : vector<8x2xf32>
    %93 = arith.negf %92 : vector<8x2xf32>
    %94 = math.exp %93 : vector<8x2xf32>
    %cst_33 = arith.constant 1.000000e+00 : f32
    %95 = vector.broadcast %cst_33 : f32 to vector<8x2xf32>
    %96 = arith.addf %95, %94 : vector<8x2xf32>
    %97 = arith.divf %95, %96 : vector<8x2xf32>
    %c0_34 = arith.constant 0 : index
    %c0_35 = arith.constant 0 : index
    %98 = vector.load %arg6[%c0_34, %c0_35] : memref<2x512xf32, #tpu.memory_space<vmem>>, vector<2x512xf32>
    %cst_36 = arith.constant dense<0.000000e+00> : vector<8x512xf32>
    %99 = tpu.matmul %97, %98, %cst_36 {dimension_numbers = #tpu.dot_dimension_numbers<[1], [0], [0], [1], [0, 0, 1, 1], [], []>} : vector<8x2xf32>, vector<2x512xf32>, vector<8x512xf32> -> vector<8x512xf32>
    %100 = arith.mulf %78, %99 : vector<8x512xf32>
    %101 = arith.addf %100, %1 : vector<8x512xf32>
    %c0_37 = arith.constant 0 : index
    %c0_38 = arith.constant 0 : index
    %c0_39 = arith.constant 0 : index
    %102 = vector.load %arg12[%c0_37, %c0_38, %c0_39] : memref<1x8x512xf32, #tpu.memory_space<vmem>>, vector<1x8x512xf32>
    %103 = vector.shape_cast %102 : vector<1x8x512xf32> to vector<8x512xf32>
    %104 = vector.shape_cast %101 : vector<8x512xf32> to vector<1x8x512xf32>
    tpu.vector_store %arg12[%c0_37, %c0_38, %c0_39], %104 {strides = array<i32>} : memref<1x8x512xf32, #tpu.memory_space<vmem>>, vector<1x8x512xf32>,
    return
  }
  func.func @transform_0(%arg0: i32) -> (i32, i32, i32) {
    %c0_i32 = arith.constant 0 : i32
    %c0_i32_0 = arith.constant 0 : i32
    %c0_i32_1 = arith.constant 0 : i32
    return %arg0, %c0_i32, %c0_i32_0 : i32, i32, i32
  }
  func.func @transform_1(%arg0: i32) -> (i32, i32) {
    %c0_i32 = arith.constant 0 : i32
    %c0_i32_0 = arith.constant 0 : i32
    %c0_i32_1 = arith.constant 0 : i32
    return %c0_i32, %c0_i32_0 : i32, i32
  }
  func.func @transform_2(%arg0: i32) -> (i32, i32) {
    %c0_i32 = arith.constant 0 : i32
    %c0_i32_0 = arith.constant 0 : i32
    %c0_i32_1 = arith.constant 0 : i32
    return %c0_i32, %c0_i32_0 : i32, i32
  }
  func.func @transform_3(%arg0: i32) -> (i32, i32) {
    %c0_i32 = arith.constant 0 : i32
    %c0_i32_0 = arith.constant 0 : i32
    %c0_i32_1 = arith.constant 0 : i32
    return %c0_i32, %c0_i32_0 : i32, i32
  }
  func.func @transform_4(%arg0: i32) -> (i32, i32) {
    %c0_i32 = arith.constant 0 : i32
    %c0_i32_0 = arith.constant 0 : i32
    %c0_i32_1 = arith.constant 0 : i32
    return %c0_i32, %c0_i32_0 : i32, i32
  }
  func.func @transform_5(%arg0: i32) -> (i32, i32) {
    %c0_i32 = arith.constant 0 : i32
    %c0_i32_0 = arith.constant 0 : i32
    %c0_i32_1 = arith.constant 0 : i32
    return %c0_i32, %c0_i32_0 : i32, i32
  }
  func.func @transform_6(%arg0: i32) -> (i32, i32) {
    %c0_i32 = arith.constant 0 : i32
    %c0_i32_0 = arith.constant 0 : i32
    %c0_i32_1 = arith.constant 0 : i32
    return %c0_i32, %c0_i32_0 : i32, i32
  }
  func.func @transform_7(%arg0: i32) -> (i32, i32) {
    %c0_i32 = arith.constant 0 : i32
    %c0_i32_0 = arith.constant 0 : i32
    %c0_i32_1 = arith.constant 0 : i32
    return %c0_i32, %c0_i32_0 : i32, i32
  }
  func.func @transform_8(%arg0: i32) -> (i32, i32) {
    %c0_i32 = arith.constant 0 : i32
    %c0_i32_0 = arith.constant 0 : i32
    %c0_i32_1 = arith.constant 0 : i32
    return %c0_i32, %c0_i32_0 : i32, i32
  }
  func.func @transform_9(%arg0: i32) -> (i32, i32) {
    %c0_i32 = arith.constant 0 : i32
    %c0_i32_0 = arith.constant 0 : i32
    %c0_i32_1 = arith.constant 0 : i32
    return %c0_i32, %c0_i32_0 : i32, i32
  }
  func.func @transform_10(%arg0: i32) -> i32 {
    %c0_i32 = arith.constant 0 : i32
    %c0_i32_0 = arith.constant 0 : i32
    return %c0_i32 : i32
  }
  func.func @transform_11(%arg0: i32) -> (i32, i32, i32) {
    %c0_i32 = arith.constant 0 : i32
    %c0_i32_0 = arith.constant 0 : i32
    %c0_i32_1 = arith.constant 0 : i32
    return %arg0, %c0_i32, %c0_i32_0 : i32, i32, i32
  }
}

</mosaic_0001>

<llo_original>
// kernel: tpu_custom_call.1
$region0: #{tpu_custom_call.1}
  #allocation0 [shape = 'u32[]', space=smem, size = 0x4, offset = 0x4, fixed_abs, tag = 'smem constant byte address 0x4 - core index']
  #allocation1 [shape = 'u32[72,128]{1,0:T(1,128)}', space=vmem, size = 0x9000, scoped, tag = 'internal scratch']
  #allocation2 [shape = 'f32[1]{0:T(128)S(6)}', space=smem, size = 0x200, scoped, tag = 'scoped memory for tpu_custom_call.1']
  %s0 = inlined_call_operand.vmem [shape: f32[2,8,512], index: 0, kind: input, shape index: {}]
  %s1 = inlined_call_operand.vmem [shape: f32[9,512], index: 1, kind: input, shape index: {}]
  %s2 = inlined_call_operand.vmem [shape: f32[16,72], index: 2, kind: input, shape index: {}]
  %s3 = inlined_call_operand.vmem [shape: f32[8,144], index: 3, kind: input, shape index: {}]
  %s4 = inlined_call_operand.vmem [shape: f32[512,2], index: 4, kind: input, shape index: {}]
  %s5 = inlined_call_operand.vmem [shape: f32[2,512], index: 5, kind: input, shape index: {}]
  %s6 = inlined_call_operand.vmem [shape: f32[2,8], index: 6, kind: input, shape index: {}]
  %s7 = inlined_call_operand.vmem [shape: f32[2,1], index: 7, kind: input, shape index: {}]
  %s8 = inlined_call_operand.vmem [shape: f32[8,2], index: 8, kind: input, shape index: {}]
  %s9 = inlined_call_operand.vmem [shape: f32[8,1], index: 9, kind: input, shape index: {}]
  %s10 = inlined_call_operand.<no memory space> [shape: f32[1], index: 10, kind: input, shape index: {}]
  %s11 = inlined_call_operand.hbm [shape: f32[2,8,512], index: 11, kind: output, shape index: {}]
  %s12 = sld [smem:[#allocation0]]
  $region77: #{tpu_custom_call.1} parent=0
    _
  %s14 = ssub.s32 1, %s12
  %s15 = scalar_select 0, %s14, %s12
  %16 = sst [smem:[#allocation2]] %s10
  $region1: #{tpu_custom_call.1} parent=0
    #allocation3 [shape = 'u8[32768]{0}', space=vmem, size = 0x8000, scoped, tag = 'output window, operand 0']
    #allocation4 [shape = 's32[2]{0}', space=sflag, size = 0x8, scoped, tag = 'scoped memory for tpu_custom_call.1']
    %17 = vsyncpa [#allocation4], 0
    %s18 = scalar_lea.sflag [#allocation4], 1
    %19 = vsyncpa %s18, 0
    loop: start=0, step=1, limit=4
    $region2: #{tpu_custom_call.1} parent=1 // loop_pre_header
      _
    $region3: #{tpu_custom_call.1} parent=1 // loop_header
      %s21 = sphi 0, %s25
      %p22 = scmp.ge.s32.totalorder %s21, 4
      %s31 = sphi 0, %s33
      %s34 = sphi 0, %s31
      %s35 = sphi 0, %s34
      %s51 = sphi 0, %s35
      %s55 = sphi 0, %s55
      %s57 = sphi 0, %s55
      %s58 = sphi 0, %s57
      %s72 = sphi 0, %s58
      %s76 = sphi 0, %s76
      %s78 = sphi 0, %s76
      %s79 = sphi 0, %s78
      %s93 = sphi 0, %s79
      %s97 = sphi 0, %s97
      %s99 = sphi 0, %s97
      %s100 = sphi 0, %s99
      %s114 = sphi 0, %s100
      %s118 = sphi 0, %s118
      %s120 = sphi 0, %s118
      %s121 = sphi 0, %s120
      %s135 = sphi 0, %s121
      %s139 = sphi 0, %s139
      %s141 = sphi 0, %s139
      %s142 = sphi 0, %s141
      %s156 = sphi 0, %s142
      %s160 = sphi 0, %s160
      %s162 = sphi 0, %s160
      %s163 = sphi 0, %s162
      %s177 = sphi 0, %s163
      %s181 = sphi 0, %s181
      %s183 = sphi 0, %s181
      %s184 = sphi 0, %s183
      %s198 = sphi 0, %s184
      %s202 = sphi 0, %s202
      %s204 = sphi 0, %s202
      %s205 = sphi 0, %s204
      %s219 = sphi 0, %s205
      %s223 = sphi 0, %s223
      %s225 = sphi 0, %s223
      %s226 = sphi 0, %s225
      %s240 = sphi 0, %s226
      %s244 = sphi 0, %s244
      %s246 = sphi 0, %s244
      %s247 = sphi 0, %s246
      %s261 = sphi 0, %s247
      %s267 = sphi 0, %s269
      %s270 = sphi 0, %s267
      %s271 = sphi 0, %s270
      %s287 = sphi 0, %s271
    $region4: #{tpu_custom_call.1} parent=1 // loop_header_branch
      %24 = sbr.rel (%p22) target = $region8
    $region5: #{tpu_custom_call.1} parent=1 // loop_body
      %s26 = ssub.s32 %s21, 1
      %s27 = ssub.s32 %s21, 2
      %s28 = sadd.s32 %s21, 1
      %s29 = ssub.s32 %s21, %s28
      %p30 = scmp.eq.s32.totalorder %s29, 0
      %s32 = sadd.s32 %s31, 1
      %s33 = scalar_select %p30, %s31, %s32
      %p36 = pneg %p30
      %p37 = scmp.eq.s32.totalorder %s21, 1
      %p38 = por %p36, %p37
      %p39 = scmp.ne.s32.totalorder %s31, %s34
      %p40 = scmp.eq.s32.totalorder %s21, 0
      %p41 = por %p39, %p40
      %p42 = scmp.ne.s32.totalorder %s31, %s34
      %p43 = scmp.eq.s32.totalorder %s26, 1
      %p44 = por %p42, %p43
      %p45 = scmp.ne.s32.totalorder %s34, %s35
      %p46 = scmp.eq.s32.totalorder %s26, 0
      %p47 = por %p45, %p46
      %p48 = scmp.ne.s32.totalorder %s34, %s35
      %p49 = scmp.eq.s32.totalorder %s27, 1
      %p50 = por %p48, %p49
      %p52 = scmp.ne.s32.totalorder %s35, %s51
      %p53 = scmp.eq.s32.totalorder %s27, 0
      %p54 = por %p52, %p53
      %s56 = sadd.s32 %s55, 1
      %p59 = scmp.eq.s32.totalorder %s21, 1
      %p60 = scmp.ne.s32.totalorder %s55, %s57
      %p61 = scmp.eq.s32.totalorder %s21, 0
      %p62 = por %p60, %p61
      %p63 = scmp.ne.s32.totalorder %s55, %s57
      %p64 = scmp.eq.s32.totalorder %s26, 1
      %p65 = por %p63, %p64
      %p66 = scmp.ne.s32.totalorder %s57, %s58
      %p67 = scmp.eq.s32.totalorder %s26, 0
      %p68 = por %p66, %p67
      %p69 = scmp.ne.s32.totalorder %s57, %s58
      %p70 = scmp.eq.s32.totalorder %s27, 1
      %p71 = por %p69, %p70
      %p73 = scmp.ne.s32.totalorder %s58, %s72
      %p74 = scmp.eq.s32.totalorder %s27, 0
      %p75 = por %p73, %p74
      %s77 = sadd.s32 %s76, 1
      %p80 = scmp.eq.s32.totalorder %s21, 1
      %p81 = scmp.ne.s32.totalorder %s76, %s78
      %p82 = scmp.eq.s32.totalorder %s21, 0
      %p83 = por %p81, %p82
      %p84 = scmp.ne.s32.totalorder %s76, %s78
      %p85 = scmp.eq.s32.totalorder %s26, 1
      %p86 = por %p84, %p85
      %p87 = scmp.ne.s32.totalorder %s78, %s79
      %p88 = scmp.eq.s32.totalorder %s26, 0
      %p89 = por %p87, %p88
      %p90 = scmp.ne.s32.totalorder %s78, %s79
      %p91 = scmp.eq.s32.totalorder %s27, 1
      %p92 = por %p90, %p91
      %p94 = scmp.ne.s32.totalorder %s79, %s93
      %p95 = scmp.eq.s32.totalorder %s27, 0
      %p96 = por %p94, %p95
      %s98 = sadd.s32 %s97, 1
      %p101 = scmp.eq.s32.totalorder %s21, 1
      %p102 = scmp.ne.s32.totalorder %s97, %s99
      %p103 = scmp.eq.s32.totalorder %s21, 0
      %p104 = por %p102, %p103
      %p105 = scmp.ne.s32.totalorder %s97, %s99
      %p106 = scmp.eq.s32.totalorder %s26, 1
      %p107 = por %p105, %p106
      %p108 = scmp.ne.s32.totalorder %s99, %s100
      %p109 = scmp.eq.s32.totalorder %s26, 0
      %p110 = por %p108, %p109
      %p111 = scmp.ne.s32.totalorder %s99, %s100
      %p112 = scmp.eq.s32.totalorder %s27, 1
      %p113 = por %p111, %p112
      %p115 = scmp.ne.s32.totalorder %s100, %s114
      %p116 = scmp.eq.s32.totalorder %s27, 0
      %p117 = por %p115, %p116
      %s119 = sadd.s32 %s118, 1
      %p122 = scmp.eq.s32.totalorder %s21, 1
      %p123 = scmp.ne.s32.totalorder %s118, %s120
      %p124 = scmp.eq.s32.totalorder %s21, 0
      %p125 = por %p123, %p124
      %p126 = scmp.ne.s32.totalorder %s118, %s120
      %p127 = scmp.eq.s32.totalorder %s26, 1
      %p128 = por %p126, %p127
      %p129 = scmp.ne.s32.totalorder %s120, %s121
      %p130 = scmp.eq.s32.totalorder %s26, 0
      %p131 = por %p129, %p130
      %p132 = scmp.ne.s32.totalorder %s120, %s121
      %p133 = scmp.eq.s32.totalorder %s27, 1
      %p134 = por %p132, %p133
      %p136 = scmp.ne.s32.totalorder %s121, %s135
      %p137 = scmp.eq.s32.totalorder %s27, 0
      %p138 = por %p136, %p137
      %s140 = sadd.s32 %s139, 1
      %p143 = scmp.eq.s32.totalorder %s21, 1
      %p144 = scmp.ne.s32.totalorder %s139, %s141
      %p145 = scmp.eq.s32.totalorder %s21, 0
      %p146 = por %p144, %p145
      %p147 = scmp.ne.s32.totalorder %s139, %s141
      %p148 = scmp.eq.s32.totalorder %s26, 1
      %p149 = por %p147, %p148
      %p150 = scmp.ne.s32.totalorder %s141, %s142
      %p151 = scmp.eq.s32.totalorder %s26, 0
      %p152 = por %p150, %p151
      %p153 = scmp.ne.s32.totalorder %s141, %s142
      %p154 = scmp.eq.s32.totalorder %s27, 1
      %p155 = por %p153, %p154
      %p157 = scmp.ne.s32.totalorder %s142, %s156
      %p158 = scmp.eq.s32.totalorder %s27, 0
      %p159 = por %p157, %p158
      %s161 = sadd.s32 %s160, 1
      %p164 = scmp.eq.s32.totalorder %s21, 1
      %p165 = scmp.ne.s32.totalorder %s160, %s162
      %p166 = scmp.eq.s32.totalorder %s21, 0
      %p167 = por %p165, %p166
      %p168 = scmp.ne.s32.totalorder %s160, %s162
      %p169 = scmp.eq.s32.totalorder %s26, 1
      %p170 = por %p168, %p169
      %p171 = scmp.ne.s32.totalorder %s162, %s163
      %p172 = scmp.eq.s32.totalorder %s26, 0
      %p173 = por %p171, %p172
      %p174 = scmp.ne.s32.totalorder %s162, %s163
      %p175 = scmp.eq.s32.totalorder %s27, 1
      %p176 = por %p174, %p175
      %p178 = scmp.ne.s32.totalorder %s163, %s177
      %p179 = scmp.eq.s32.totalorder %s27, 0
      %p180 = por %p178, %p179
      %s182 = sadd.s32 %s181, 1
      %p185 = scmp.eq.s32.totalorder %s21, 1
      %p186 = scmp.ne.s32.totalorder %s181, %s183
      %p187 = scmp.eq.s32.totalorder %s21, 0
      %p188 = por %p186, %p187
      %p189 = scmp.ne.s32.totalorder %s181, %s183
      %p190 = scmp.eq.s32.totalorder %s26, 1
      %p191 = por %p189, %p190
      %p192 = scmp.ne.s32.totalorder %s183, %s184
      %p193 = scmp.eq.s32.totalorder %s26, 0
      %p194 = por %p192, %p193
      %p195 = scmp.ne.s32.totalorder %s183, %s184
      %p196 = scmp.eq.s32.totalorder %s27, 1
      %p197 = por %p195, %p196
      %p199 = scmp.ne.s32.totalorder %s184, %s198
      %p200 = scmp.eq.s32.totalorder %s27, 0
      %p201 = por %p199, %p200
      %s203 = sadd.s32 %s202, 1
      %p206 = scmp.eq.s32.totalorder %s21, 1
      %p207 = scmp.ne.s32.totalorder %s202, %s204
      %p208 = scmp.eq.s32.totalorder %s21, 0
      %p209 = por %p207, %p208
      %p210 = scmp.ne.s32.totalorder %s202, %s204
      %p211 = scmp.eq.s32.totalorder %s26, 1
      %p212 = por %p210, %p211
      %p213 = scmp.ne.s32.totalorder %s204, %s205
      %p214 = scmp.eq.s32.totalorder %s26, 0
      %p215 = por %p213, %p214
      %p216 = scmp.ne.s32.totalorder %s204, %s205
      %p217 = scmp.eq.s32.totalorder %s27, 1
      %p218 = por %p216, %p217
      %p220 = scmp.ne.s32.totalorder %s205, %s219
      %p221 = scmp.eq.s32.totalorder %s27, 0
      %p222 = por %p220, %p221
      %s224 = sadd.s32 %s223, 1
      %p227 = scmp.eq.s32.totalorder %s21, 1
      %p228 = scmp.ne.s32.totalorder %s223, %s225
      %p229 = scmp.eq.s32.totalorder %s21, 0
      %p230 = por %p228, %p229
      %p231 = scmp.ne.s32.totalorder %s223, %s225
      %p232 = scmp.eq.s32.totalorder %s26, 1
      %p233 = por %p231, %p232
      %p234 = scmp.ne.s32.totalorder %s225, %s226
      %p235 = scmp.eq.s32.totalorder %s26, 0
      %p236 = por %p234, %p235
      %p237 = scmp.ne.s32.totalorder %s225, %s226
      %p238 = scmp.eq.s32.totalorder %s27, 1
      %p239 = por %p237, %p238
      %p241 = scmp.ne.s32.totalorder %s226, %s240
      %p242 = scmp.eq.s32.totalorder %s27, 0
      %p243 = por %p241, %p242
      %s245 = sadd.s32 %s244, 1
      %p248 = scmp.eq.s32.totalorder %s21, 1
      %p249 = scmp.ne.s32.totalorder %s244, %s246
      %p250 = scmp.eq.s32.totalorder %s21, 0
      %p251 = por %p249, %p250
      %p252 = scmp.ne.s32.totalorder %s244, %s246
      %p253 = scmp.eq.s32.totalorder %s26, 1
      %p254 = por %p252, %p253
      %p255 = scmp.ne.s32.totalorder %s246, %s247
      %p256 = scmp.eq.s32.totalorder %s26, 0
      %p257 = por %p255, %p256
      %p258 = scmp.ne.s32.totalorder %s246, %s247
      %p259 = scmp.eq.s32.totalorder %s27, 1
      %p260 = por %p258, %p259
      %p262 = scmp.ne.s32.totalorder %s247, %s261
      %p263 = scmp.eq.s32.totalorder %s27, 0
      %p264 = por %p262, %p263
      %s265 = ssub.s32 %s21, %s28
      %p266 = scmp.eq.s32.totalorder %s265, 0
      %s268 = sadd.s32 %s267, 1
      %s269 = scalar_select %p266, %s267, %s268
      %p272 = pneg %p266
      %p273 = scmp.eq.s32.totalorder %s21, 1
      %p274 = por %p272, %p273
      %p275 = scmp.ne.s32.totalorder %s267, %s270
      %p276 = scmp.eq.s32.totalorder %s21, 0
      %p277 = por %p275, %p276
      %p278 = scmp.ne.s32.totalorder %s267, %s270
      %p279 = scmp.eq.s32.totalorder %s26, 1
      %p280 = por %p278, %p279
      %p281 = scmp.ne.s32.totalorder %s270, %s271
      %p282 = scmp.eq.s32.totalorder %s26, 0
      %p283 = por %p281, %p282
      %p284 = scmp.ne.s32.totalorder %s270, %s271
      %p285 = scmp.eq.s32.totalorder %s27, 1
      %p286 = por %p284, %p285
      %p288 = scmp.ne.s32.totalorder %s271, %s287
      %p289 = scmp.eq.s32.totalorder %s27, 0
      %p290 = por %p288, %p289
      %p291 = scmp.le.s32.totalorder 1, %s21
      %p292 = scmp.lt.s32.totalorder %s21, 3
      %p293 = pnand %p291, %p292
      %p294 = pneg %p293
      // Predicated region
      $region9: #{tpu_custom_call.1} parent=5 // pred_check
        _
      $region10: #{tpu_custom_call.1} parent=5 // pred_check_branch
        %296 = sbr.rel (%p293) target = $region12
      $region11: #{tpu_custom_call.1} parent=5 // pred_region
        %s297 = ssub.s32 %s21, 1
        // Predicated region
        $region13: #{tpu_custom_call.1} parent=11 // pred_check
          %p298 = pneg %p68
        $region14: #{tpu_custom_call.1} parent=11 // pred_check_branch
          %300 = sbr.rel (%p298) target = $region16
        $region15: #{tpu_custom_call.1} parent=11 // pred_region
          _
        $region16: #{tpu_custom_call.1} parent=11 // pred_fallthru
          _
        // Predicated region
        $region17: #{tpu_custom_call.1} parent=11 // pred_check
          %p301 = pneg %p89
        $region18: #{tpu_custom_call.1} parent=11 // pred_check_branch
          %303 = sbr.rel (%p301) target = $region20
        $region19: #{tpu_custom_call.1} parent=11 // pred_region
          _
        $region20: #{tpu_custom_call.1} parent=11 // pred_fallthru
          _
        // Predicated region
        $region21: #{tpu_custom_call.1} parent=11 // pred_check
          %p304 = pneg %p110
        $region22: #{tpu_custom_call.1} parent=11 // pred_check_branch
          %306 = sbr.rel (%p304) target = $region24
        $region23: #{tpu_custom_call.1} parent=11 // pred_region
          _
        $region24: #{tpu_custom_call.1} parent=11 // pred_fallthru
          _
        // Predicated region
        $region25: #{tpu_custom_call.1} parent=11 // pred_check
          %p307 = pneg %p131
        $region26: #{tpu_custom_call.1} parent=11 // pred_check_branch
          %309 = sbr.rel (%p307) target = $region28
        $region27: #{tpu_custom_call.1} parent=11 // pred_region
          _
        $region28: #{tpu_custom_call.1} parent=11 // pred_fallthru
          _
        // Predicated region
        $region29: #{tpu_custom_call.1} parent=11 // pred_check
          %p310 = pneg %p152
        $region30: #{tpu_custom_call.1} parent=11 // pred_check_branch
          %312 = sbr.rel (%p310) target = $region32
        $region31: #{tpu_custom_call.1} parent=11 // pred_region
          _
        $region32: #{tpu_custom_call.1} parent=11 // pred_fallthru
          _
        // Predicated region
        $region33: #{tpu_custom_call.1} parent=11 // pred_check
          %p313 = pneg %p173
        $region34: #{tpu_custom_call.1} parent=11 // pred_check_branch
          %315 = sbr.rel (%p313) target = $region36
        $region35: #{tpu_custom_call.1} parent=11 // pred_region
          _
        $region36: #{tpu_custom_call.1} parent=11 // pred_fallthru
          _
        // Predicated region
        $region37: #{tpu_custom_call.1} parent=11 // pred_check
          %p316 = pneg %p194
        $region38: #{tpu_custom_call.1} parent=11 // pred_check_branch
          %318 = sbr.rel (%p316) target = $region40
        $region39: #{tpu_custom_call.1} parent=11 // pred_region
          _
        $region40: #{tpu_custom_call.1} parent=11 // pred_fallthru
          _
        // Predicated region
        $region41: #{tpu_custom_call.1} parent=11 // pred_check
          %p319 = pneg %p215
        $region42: #{tpu_custom_call.1} parent=11 // pred_check_branch
          %321 = sbr.rel (%p319) target = $region44
        $region43: #{tpu_custom_call.1} parent=11 // pred_region
          _
        $region44: #{tpu_custom_call.1} parent=11 // pred_fallthru
          _
        // Predicated region
        $region45: #{tpu_custom_call.1} parent=11 // pred_check
          %p322 = pneg %p236
        $region46: #{tpu_custom_call.1} parent=11 // pred_check_branch
          %324 = sbr.rel (%p322) target = $region48
        $region47: #{tpu_custom_call.1} parent=11 // pred_region
          _
        $region48: #{tpu_custom_call.1} parent=11 // pred_fallthru
          _
        // Predicated region
        $region49: #{tpu_custom_call.1} parent=11 // pred_check
          %p325 = pneg %p257
        $region50: #{tpu_custom_call.1} parent=11 // pred_check_branch
          %327 = sbr.rel (%p325) target = $region52
        $region51: #{tpu_custom_call.1} parent=11 // pred_region
          _
        $region52: #{tpu_custom_call.1} parent=11 // pred_fallthru
          _
      $region12: #{tpu_custom_call.1} parent=5 // pred_fallthru
        _
      %p328 = scmp.lt.s32.totalorder %s21, 2
      // Predicated region
      $region53: #{tpu_custom_call.1} parent=5 // pred_check
        %p329 = pneg %p328
      $region54: #{tpu_custom_call.1} parent=5 // pred_check_branch
        %331 = sbr.rel (%p329) target = $region56
      $region55: #{tpu_custom_call.1} parent=5 // pred_region
        // Predicated region
        $region57: #{tpu_custom_call.1} parent=55 // pred_check
          %p332 = pneg %p41
        $region58: #{tpu_custom_call.1} parent=55 // pred_check_branch
          %334 = sbr.rel (%p332) target = $region60
        $region59: #{tpu_custom_call.1} parent=55 // pred_region
          %p335 = scmp.lt.s32.totalorder %s21, 1
          %s336 = scalar_select %p335, %s21, 1
          %s337 = smul.addr %s336, 4
          %s338 = smul.addr %s337, 8
          %s339 = scalar_lea.vmem %s0, %s338
        $region60: #{tpu_custom_call.1} parent=55 // pred_fallthru
          _
      $region56: #{tpu_custom_call.1} parent=5 // pred_fallthru
        _
      %p340 = scmp.le.s32.totalorder 1, %s21
      %p341 = scmp.lt.s32.totalorder %s21, 3
      %p342 = pnand %p340, %p341
      %p343 = pneg %p342
      // Predicated region
      $region61: #{tpu_custom_call.1} parent=5 // pred_check
        _
      $region62: #{tpu_custom_call.1} parent=5 // pred_check_branch
        %345 = sbr.rel (%p342) target = $region64
      $region63: #{tpu_custom_call.1} parent=5 // pred_region
        %s346 = ssub.s32 %s21, 1
        %p347 = scmp.lt.s32.totalorder %s26, 1
        %s348 = scalar_select %p347, %s26, 1
        %s349 = smul.addr %s348, 4
        %s350 = smul.addr %s349, 8
        %s351 = scalar_lea.vmem %s0, %s350
        %p352 = pneg %p47
        %p353 = pneg %p44
        %p354 = pneg %p68
        %p355 = pneg %p65
        %p356 = pneg %p89
        %p357 = pneg %p86
        %p358 = pneg %p110
        %p359 = pneg %p107
        %p360 = pneg %p131
        %p361 = pneg %p128
        %p362 = pneg %p152
        %p363 = pneg %p149
        %p364 = pneg %p173
        %p365 = pneg %p170
        %p366 = pneg %p194
        %p367 = pneg %p191
        %p368 = pneg %p215
        %p369 = pneg %p212
        %p370 = pneg %p236
        %p371 = pneg %p233
        %p372 = pneg %p257
        %p373 = pneg %p254
        %p374 = pneg %p283
        %p375 = pneg %p280
        %s376 = sand.u32 %s270, 1
        %s377 = scalar_lea.sflag [#allocation4], %s376
        %s378 = sand.u32 %s270, 1
        %s379 = smul.addr %s378, 32
        %s380 = scalar_lea.vmem [#allocation3], %s379
        %p381 = scmp.lt.s32.totalorder %s26, 1
        %s382 = scalar_select %p381, %s26, 1
        %s383 = smul.addr %s382, 4
        %s384 = smul.addr %s383, 8
        %s385 = scalar_lea.vmem %s0, %s384
        %v386 = vld [vmem:[%s385] sm:$0xff]
        %v387 = vld [vmem:[%s385 + $0x8] sm:$0xff]
        %v388 = vld [vmem:[%s385 + $0x10] sm:$0xff]
        %v389 = vld [vmem:[%s385 + $0x18] sm:$0xff]
        %v390 = vld [vmem:[%s1] sm:$0xff]
        %v391 = vld [vmem:[%s1 + $0x8] sm:$0xff]
        %v392 = vld [vmem:[%s1 + $0x10] sm:$0xff]
        %v393 = vld [vmem:[%s1 + $0x18] sm:$0xff]
        %v394 = vld [vmem:[%s1 + $0x20] sm:$0x1]
        %v395 = vld [vmem:[%s1 + $0x28] sm:$0x1]
        %v396 = vld [vmem:[%s1 + $0x30] sm:$0x1]
        %v397 = vld [vmem:[%s1 + $0x38] sm:$0x1]
        %v398 = vld [vmem:[%s2] sm:$0xff]
        %v399 = vld [vmem:[%s2 + $0x8] sm:$0xff]
        %400 = vrot.lane.b32.xlu0 %v386, 17
        %v401 = vpop.permute.xlu0 %400
        %402 = vrot.lane.b32.xlu0 %v387, 17
        %v403 = vpop.permute.xlu0 %402
        %404 = vrot.lane.b32.xlu0 %v388, 17
        %v405 = vpop.permute.xlu0 %404
        %406 = vrot.lane.b32.xlu0 %v389, 17
        %v407 = vpop.permute.xlu0 %406
        %v408 = vlaneseq
        %v409 = vand.u32 %v408, 127
        %vm410 = vcmp.lt.s32.totalorder %v409, 17
        %v411 = vsel %vm410, %v405, %v407
        %v412 = vsel %vm410, %v403, %v405
        %v413 = vsel %vm410, %v401, %v403
        %v414 = vsel %vm410, %v407, %v401
        %v415 = vperm.slane %v390, 0
        %v416 = vperm.slane %v391, 0
        %v417 = vperm.slane %v392, 0
        %v418 = vperm.slane %v393, 0
        %v419 = vmul.f32 %v414, %v415
        %v420 = vmul.f32 %v413, %v416
        %v421 = vmul.f32 %v412, %v417
        %v422 = vmul.f32 %v411, %v418
        %423 = vrot.lane.b32.xlu0 %v386, 16
        %v424 = vpop.permute.xlu0 %423
        %425 = vrot.lane.b32.xlu0 %v387, 16
        %v426 = vpop.permute.xlu0 %425
        %427 = vrot.lane.b32.xlu0 %v388, 16
        %v428 = vpop.permute.xlu0 %427
        %429 = vrot.lane.b32.xlu0 %v389, 16
        %v430 = vpop.permute.xlu0 %429
        %vm431 = vcmp.lt.s32.totalorder %v409, 16
        %v432 = vsel %vm431, %v428, %v430
        %v433 = vsel %vm431, %v426, %v428
        %v434 = vsel %vm431, %v424, %v426
        %v435 = vsel %vm431, %v430, %v424
        %v436 = vperm.slane %v390, 1
        %v437 = vperm.slane %v391, 1
        %v438 = vperm.slane %v392, 1
        %v439 = vperm.slane %v393, 1
        %v440 = vmul.f32 %v435, %v436
        %v441 = vmul.f32 %v434, %v437
        %v442 = vmul.f32 %v433, %v438
        %v443 = vmul.f32 %v432, %v439
        %444 = vrot.lane.b32.xlu0 %v386, 15
        %v445 = vpop.permute.xlu0 %444
        %446 = vrot.lane.b32.xlu0 %v387, 15
        %v447 = vpop.permute.xlu0 %446
        %448 = vrot.lane.b32.xlu0 %v388, 15
        %v449 = vpop.permute.xlu0 %448
        %450 = vrot.lane.b32.xlu0 %v389, 15
        %v451 = vpop.permute.xlu0 %450
        %vm452 = vcmp.lt.s32.totalorder %v409, 15
        %v453 = vsel %vm452, %v449, %v451
        %v454 = vsel %vm452, %v447, %v449
        %v455 = vsel %vm452, %v445, %v447
        %v456 = vsel %vm452, %v451, %v445
        %v457 = vperm.slane %v390, 2
        %v458 = vperm.slane %v391, 2
        %v459 = vperm.slane %v392, 2
        %v460 = vperm.slane %v393, 2
        %v461 = vmul.f32 %v456, %v457
        %v462 = vmul.f32 %v455, %v458
        %v463 = vmul.f32 %v454, %v459
        %v464 = vmul.f32 %v453, %v460
        %465 = vrot.lane.b32.xlu0 %v386, 1
        %v466 = vpop.permute.xlu0 %465
        %467 = vrot.lane.b32.xlu0 %v387, 1
        %v468 = vpop.permute.xlu0 %467
        %469 = vrot.lane.b32.xlu0 %v388, 1
        %v470 = vpop.permute.xlu0 %469
        %471 = vrot.lane.b32.xlu0 %v389, 1
        %v472 = vpop.permute.xlu0 %471
        %vm473 = vcmp.lt.s32.totalorder %v409, 1
        %v474 = vsel %vm473, %v470, %v472
        %v475 = vsel %vm473, %v468, %v470
        %v476 = vsel %vm473, %v466, %v468
        %v477 = vsel %vm473, %v472, %v466
        %v478 = vperm.slane %v390, 3
        %v479 = vperm.slane %v391, 3
        %v480 = vperm.slane %v392, 3
        %v481 = vperm.slane %v393, 3
        %v482 = vmul.f32 %v477, %v478
        %v483 = vmul.f32 %v476, %v479
        %v484 = vmul.f32 %v475, %v480
        %v485 = vmul.f32 %v474, %v481
        %486 = vrot.lane.b32.xlu0 %v386, 127
        %v487 = vpop.permute.xlu0 %486
        %488 = vrot.lane.b32.xlu0 %v387, 127
        %v489 = vpop.permute.xlu0 %488
        %490 = vrot.lane.b32.xlu0 %v388, 127
        %v491 = vpop.permute.xlu0 %490
        %492 = vrot.lane.b32.xlu0 %v389, 127
        %v493 = vpop.permute.xlu0 %492
        %vm494 = vcmp.lt.s32.totalorder %v409, 127
        %v495 = vsel %vm494, %v491, %v493
        %v496 = vsel %vm494, %v489, %v491
        %v497 = vsel %vm494, %v487, %v489
        %v498 = vsel %vm494, %v493, %v487
        %v499 = vperm.slane %v390, 5
        %v500 = vperm.slane %v391, 5
        %v501 = vperm.slane %v392, 5
        %v502 = vperm.slane %v393, 5
        %v503 = vmul.f32 %v497, %v499
        %v504 = vmul.f32 %v496, %v500
        %v505 = vmul.f32 %v495, %v501
        %v506 = vmul.f32 %v498, %v502
        %507 = vrot.lane.b32.xlu0 %v386, 113
        %v508 = vpop.permute.xlu0 %507
        %509 = vrot.lane.b32.xlu0 %v387, 113
        %v510 = vpop.permute.xlu0 %509
        %511 = vrot.lane.b32.xlu0 %v388, 113
        %v512 = vpop.permute.xlu0 %511
        %513 = vrot.lane.b32.xlu0 %v389, 113
        %v514 = vpop.permute.xlu0 %513
        %vm515 = vcmp.lt.s32.totalorder %v409, 113
        %v516 = vsel %vm515, %v512, %v514
        %v517 = vsel %vm515, %v510, %v512
        %v518 = vsel %vm515, %v508, %v510
        %v519 = vsel %vm515, %v514, %v508
        %v520 = vperm.slane %v390, 6
        %v521 = vperm.slane %v391, 6
        %v522 = vperm.slane %v392, 6
        %v523 = vperm.slane %v393, 6
        %v524 = vmul.f32 %v518, %v520
        %v525 = vmul.f32 %v517, %v521
        %v526 = vmul.f32 %v516, %v522
        %v527 = vmul.f32 %v519, %v523
        %528 = vrot.lane.b32.xlu0 %v386, 112
        %v529 = vpop.permute.xlu0 %528
        %530 = vrot.lane.b32.xlu0 %v387, 112
        %v531 = vpop.permute.xlu0 %530
        %532 = vrot.lane.b32.xlu0 %v388, 112
        %v533 = vpop.permute.xlu0 %532
        %534 = vrot.lane.b32.xlu0 %v389, 112
        %v535 = vpop.permute.xlu0 %534
        %vm536 = vcmp.lt.s32.totalorder %v409, 112
        %v537 = vsel %vm536, %v533, %v535
        %v538 = vsel %vm536, %v531, %v533
        %v539 = vsel %vm536, %v529, %v531
        %v540 = vsel %vm536, %v535, %v529
        %v541 = vperm.slane %v390, 7
        %v542 = vperm.slane %v391, 7
        %v543 = vperm.slane %v392, 7
        %v544 = vperm.slane %v393, 7
        %v545 = vmul.f32 %v539, %v541
        %v546 = vmul.f32 %v538, %v542
        %v547 = vmul.f32 %v537, %v543
        %v548 = vmul.f32 %v540, %v544
        %549 = vrot.lane.b32.xlu0 %v386, 111
        %v550 = vpop.permute.xlu0 %549
        %551 = vrot.lane.b32.xlu0 %v387, 111
        %v552 = vpop.permute.xlu0 %551
        %553 = vrot.lane.b32.xlu0 %v388, 111
        %v554 = vpop.permute.xlu0 %553
        %555 = vrot.lane.b32.xlu0 %v389, 111
        %v556 = vpop.permute.xlu0 %555
        %vm557 = vcmp.lt.s32.totalorder %v409, 111
        %v558 = vsel %vm557, %v554, %v556
        %v559 = vsel %vm557, %v552, %v554
        %v560 = vsel %vm557, %v550, %v552
        %v561 = vsel %vm557, %v556, %v550
        %v562 = vperm.slane %v394, 0
        %v563 = vperm.slane %v395, 0
        %v564 = vperm.slane %v396, 0
        %v565 = vperm.slane %v397, 0
        %v566 = vmul.f32 %v560, %v562
        %v567 = vmul.f32 %v559, %v563
        %v568 = vmul.f32 %v558, %v564
        %v569 = vmul.f32 %v561, %v565
        %vm570 = vcmask 588800
        %v572 = vsel %vm570, %v398, 0
        %v575 = vsel %vm570, %v399, 0
        %577 = vmatpush.msra.mxu0 0.0
        %578 = vmatpush.msra.mxu0 0.0
        %579 = vmatpush.msra.mxu0 0.0
        %580 = vmatpush.msra.mxu0 0.0
        %581 = vmatpush.msra.mxu0 0.0
        %582 = vmatpush.msra.mxu0 0.0
        %583 = vmatpush.msra.mxu0 0.0
        %584 = vmatpush.msra.mxu0 %v566
        %585 = vmatpush.msra.mxu0 %v545
        %586 = vmatpush.msra.mxu0 %v524
        %587 = vmatpush.msra.mxu0 %v503
        %588 = vmatpush.msra.mxu0 %v386
        %589 = vmatpush.msra.mxu0 %v482
        %590 = vmatpush.msra.mxu0 %v461
        %591 = vmatpush.msra.mxu0 %v440
        %592 = vmatpush.msra.mxu0 %v419
        %593 = vmatmul.f32.gmra.mxu0 %v572
        %v594 = vpop.f32.mrf.mxu0
        %v595 = vadd.f32 0.0, %v594
        %596 = vmatmul.f32.gmra.mxu0 %v575
        %v597 = vpop.f32.mrf.mxu0
        %v598 = vadd.f32 0.0, %v597
        %599 = vdwg.mxu0
        %600 = vmatpush.msra.mxu0 0.0
        %601 = vmatpush.msra.mxu0 0.0
        %602 = vmatpush.msra.mxu0 0.0
        %603 = vmatpush.msra.mxu0 0.0
        %604 = vmatpush.msra.mxu0 0.0
        %605 = vmatpush.msra.mxu0 0.0
        %606 = vmatpush.msra.mxu0 0.0
        %607 = vmatpush.msra.mxu0 %v567
        %608 = vmatpush.msra.mxu0 %v546
        %609 = vmatpush.msra.mxu0 %v525
        %610 = vmatpush.msra.mxu0 %v504
        %611 = vmatpush.msra.mxu0 %v387
        %612 = vmatpush.msra.mxu0 %v483
        %613 = vmatpush.msra.mxu0 %v462
        %614 = vmatpush.msra.mxu0 %v441
        %615 = vmatpush.msra.mxu0 %v420
        %616 = vmatmul.f32.gmra.mxu0 %v572
        %v617 = vpop.f32.mrf.mxu0
        %v618 = vadd.f32 0.0, %v617
        %619 = vmatmul.f32.gmra.mxu0 %v575
        %v620 = vpop.f32.mrf.mxu0
        %v621 = vadd.f32 0.0, %v620
        %622 = vdwg.mxu0
        %623 = vmatpush.msra.mxu0 0.0
        %624 = vmatpush.msra.mxu0 0.0
        %625 = vmatpush.msra.mxu0 0.0
        %626 = vmatpush.msra.mxu0 0.0
        %627 = vmatpush.msra.mxu0 0.0
        %628 = vmatpush.msra.mxu0 0.0
        %629 = vmatpush.msra.mxu0 0.0
        %630 = vmatpush.msra.mxu0 %v568
        %631 = vmatpush.msra.mxu0 %v547
        %632 = vmatpush.msra.mxu0 %v526
        %633 = vmatpush.msra.mxu0 %v505
        %634 = vmatpush.msra.mxu0 %v388
        %635 = vmatpush.msra.mxu0 %v484
        %636 = vmatpush.msra.mxu0 %v463
        %637 = vmatpush.msra.mxu0 %v442
        %638 = vmatpush.msra.mxu0 %v421
        %639 = vmatmul.f32.gmra.mxu0 %v572
        %v640 = vpop.f32.mrf.mxu0
        %v641 = vadd.f32 0.0, %v640
        %642 = vmatmul.f32.gmra.mxu0 %v575
        %v643 = vpop.f32.mrf.mxu0
        %v644 = vadd.f32 0.0, %v643
        %645 = vdwg.mxu0
        %646 = vmatpush.msra.mxu0 0.0
        %647 = vmatpush.msra.mxu0 0.0
        %648 = vmatpush.msra.mxu0 0.0
        %649 = vmatpush.msra.mxu0 0.0
        %650 = vmatpush.msra.mxu0 0.0
        %651 = vmatpush.msra.mxu0 0.0
        %652 = vmatpush.msra.mxu0 0.0
        %653 = vmatpush.msra.mxu0 %v569
        %654 = vmatpush.msra.mxu0 %v548
        %655 = vmatpush.msra.mxu0 %v527
        %656 = vmatpush.msra.mxu0 %v506
        %657 = vmatpush.msra.mxu0 %v389
        %658 = vmatpush.msra.mxu0 %v485
        %659 = vmatpush.msra.mxu0 %v464
        %660 = vmatpush.msra.mxu0 %v443
        %661 = vmatpush.msra.mxu0 %v422
        %662 = vmatmul.f32.gmra.mxu0 %v572
        %v663 = vpop.f32.mrf.mxu0
        %v664 = vadd.f32 0.0, %v663
        %665 = vmatmul.f32.gmra.mxu0 %v575
        %v666 = vpop.f32.mrf.mxu0
        %v667 = vadd.f32 0.0, %v666
        %668 = vdwg.mxu0
        %s669 = sld [smem:[#allocation2]]
        %vm670 = vcmp.gt.f32.partialorder %v595, 0.0
        %vm671 = vcmp.gt.f32.partialorder %v618, 0.0
        %vm672 = vcmp.gt.f32.partialorder %v641, 0.0
        %vm673 = vcmp.gt.f32.partialorder %v664, 0.0
        %vm674 = vcmp.gt.f32.partialorder %v598, 0.0
        %vm675 = vcmp.gt.f32.partialorder %v621, 0.0
        %vm676 = vcmp.gt.f32.partialorder %v644, 0.0
        %vm677 = vcmp.gt.f32.partialorder %v667, 0.0
        %v678 = vstv %s669
        %v679 = vmul.f32 %v678, %v595
        %v680 = vmul.f32 %v678, %v618
        %v681 = vmul.f32 %v678, %v641
        %v682 = vmul.f32 %v678, %v664
        %v683 = vmul.f32 %v678, %v598
        %v684 = vmul.f32 %v678, %v621
        %v685 = vmul.f32 %v678, %v644
        %v686 = vmul.f32 %v678, %v667
        %v687 = vsel %vm670, %v595, %v679
        %v688 = vsel %vm671, %v618, %v680
        %v689 = vsel %vm672, %v641, %v681
        %v690 = vsel %vm673, %v664, %v682
        %v691 = vsel %vm674, %v598, %v683
        %v692 = vsel %vm675, %v621, %v684
        %v693 = vsel %vm676, %v644, %v685
        %v694 = vsel %vm677, %v667, %v686
        %v695 = vld [vmem:[%s3] sm:$0xff]
        %v696 = vld [vmem:[%s3 + $0x8] sm:$0xff]
        %697 = vrot.lane.b32.xlu0 %v687, 17
        %v698 = vpop.permute.xlu0 %697
        %699 = vrot.lane.b32.xlu0 %v691, 17
        %v700 = vpop.permute.xlu0 %699
        %701 = vrot.lane.b32.xlu0 %v688, 17
        %v702 = vpop.permute.xlu0 %701
        %703 = vrot.lane.b32.xlu0 %v692, 17
        %v704 = vpop.permute.xlu0 %703
        %705 = vrot.lane.b32.xlu0 %v689, 17
        %v706 = vpop.permute.xlu0 %705
        %707 = vrot.lane.b32.xlu0 %v693, 17
        %v708 = vpop.permute.xlu0 %707
        %709 = vrot.lane.b32.xlu0 %v690, 17
        %v710 = vpop.permute.xlu0 %709
        %711 = vrot.lane.b32.xlu0 %v694, 17
        %v712 = vpop.permute.xlu0 %711
        %v713 = vsel %vm410, %v706, %v710
        %v714 = vsel %vm410, %v708, %v712
        %v715 = vsel %vm410, %v702, %v706
        %v716 = vsel %vm410, %v704, %v708
        %v717 = vsel %vm410, %v698, %v702
        %v718 = vsel %vm410, %v700, %v704
        %v719 = vsel %vm410, %v710, %v698
        %v720 = vsel %vm410, %v712, %v700
        %v721 = vmul.f32 %v719, %v415
        %v722 = vmul.f32 %v717, %v416
        %v723 = vmul.f32 %v715, %v417
        %v724 = vmul.f32 %v713, %v418
        %v725 = vmul.f32 %v720, %v415
        %v726 = vmul.f32 %v718, %v416
        %v727 = vmul.f32 %v716, %v417
        %v728 = vmul.f32 %v714, %v418
        %729 = vrot.lane.b32.xlu0 %v687, 16
        %v730 = vpop.permute.xlu0 %729
        %731 = vrot.lane.b32.xlu0 %v691, 16
        %v732 = vpop.permute.xlu0 %731
        %733 = vrot.lane.b32.xlu0 %v688, 16
        %v734 = vpop.permute.xlu0 %733
        %735 = vrot.lane.b32.xlu0 %v692, 16
        %v736 = vpop.permute.xlu0 %735
        %737 = vrot.lane.b32.xlu0 %v689, 16
        %v738 = vpop.permute.xlu0 %737
        %739 = vrot.lane.b32.xlu0 %v693, 16
        %v740 = vpop.permute.xlu0 %739
        %741 = vrot.lane.b32.xlu0 %v690, 16
        %v742 = vpop.permute.xlu0 %741
        %743 = vrot.lane.b32.xlu0 %v694, 16
        %v744 = vpop.permute.xlu0 %743
        %v745 = vsel %vm431, %v738, %v742
        %v746 = vsel %vm431, %v740, %v744
        %v747 = vsel %vm431, %v734, %v738
        %v748 = vsel %vm431, %v736, %v740
        %v749 = vsel %vm431, %v730, %v734
        %v750 = vsel %vm431, %v732, %v736
        %v751 = vsel %vm431, %v742, %v730
        %v752 = vsel %vm431, %v744, %v732
        %v753 = vmul.f32 %v751, %v436
        %v754 = vmul.f32 %v749, %v437
        %v755 = vmul.f32 %v747, %v438
        %v756 = vmul.f32 %v745, %v439
        %v757 = vmul.f32 %v752, %v436
        %v758 = vmul.f32 %v750, %v437
        %v759 = vmul.f32 %v748, %v438
        %v760 = vmul.f32 %v746, %v439
        %761 = vrot.lane.b32.xlu0 %v687, 15
        %v762 = vpop.permute.xlu0 %761
        %763 = vrot.lane.b32.xlu0 %v691, 15
        %v764 = vpop.permute.xlu0 %763
        %765 = vrot.lane.b32.xlu0 %v688, 15
        %v766 = vpop.permute.xlu0 %765
        %767 = vrot.lane.b32.xlu0 %v692, 15
        %v768 = vpop.permute.xlu0 %767
        %769 = vrot.lane.b32.xlu0 %v689, 15
        %v770 = vpop.permute.xlu0 %769
        %771 = vrot.lane.b32.xlu0 %v693, 15
        %v772 = vpop.permute.xlu0 %771
        %773 = vrot.lane.b32.xlu0 %v690, 15
        %v774 = vpop.permute.xlu0 %773
        %775 = vrot.lane.b32.xlu0 %v694, 15
        %v776 = vpop.permute.xlu0 %775
        %v777 = vsel %vm452, %v770, %v774
        %v778 = vsel %vm452, %v772, %v776
        %v779 = vsel %vm452, %v766, %v770
        %v780 = vsel %vm452, %v768, %v772
        %v781 = vsel %vm452, %v762, %v766
        %v782 = vsel %vm452, %v764, %v768
        %v783 = vsel %vm452, %v774, %v762
        %v784 = vsel %vm452, %v776, %v764
        %v785 = vmul.f32 %v783, %v457
        %v786 = vmul.f32 %v781, %v458
        %v787 = vmul.f32 %v779, %v459
        %v788 = vmul.f32 %v777, %v460
        %v789 = vmul.f32 %v784, %v457
        %v790 = vmul.f32 %v782, %v458
        %v791 = vmul.f32 %v780, %v459
        %v792 = vmul.f32 %v778, %v460
        %793 = vrot.lane.b32.xlu0 %v687, 1
        %v794 = vpop.permute.xlu0 %793
        %795 = vrot.lane.b32.xlu0 %v691, 1
        %v796 = vpop.permute.xlu0 %795
        %797 = vrot.lane.b32.xlu0 %v688, 1
        %v798 = vpop.permute.xlu0 %797
        %799 = vrot.lane.b32.xlu0 %v692, 1
        %v800 = vpop.permute.xlu0 %799
        %801 = vrot.lane.b32.xlu0 %v689, 1
        %v802 = vpop.permute.xlu0 %801
        %803 = vrot.lane.b32.xlu0 %v693, 1
        %v804 = vpop.permute.xlu0 %803
        %805 = vrot.lane.b32.xlu0 %v690, 1
        %v806 = vpop.permute.xlu0 %805
        %807 = vrot.lane.b32.xlu0 %v694, 1
        %v808 = vpop.permute.xlu0 %807
        %v809 = vsel %vm473, %v802, %v806
        %v810 = vsel %vm473, %v804, %v808
        %v811 = vsel %vm473, %v798, %v802
        %v812 = vsel %vm473, %v800, %v804
        %v813 = vsel %vm473, %v794, %v798
        %v814 = vsel %vm473, %v796, %v800
        %v815 = vsel %vm473, %v806, %v794
        %v816 = vsel %vm473, %v808, %v796
        %v817 = vmul.f32 %v815, %v478
        %v818 = vmul.f32 %v813, %v479
        %v819 = vmul.f32 %v811, %v480
        %v820 = vmul.f32 %v809, %v481
        %v821 = vmul.f32 %v816, %v478
        %v822 = vmul.f32 %v814, %v479
        %v823 = vmul.f32 %v812, %v480
        %v824 = vmul.f32 %v810, %v481
        %825 = vrot.lane.b32.xlu0 %v687, 127
        %v826 = vpop.permute.xlu0 %825
        %827 = vrot.lane.b32.xlu0 %v691, 127
        %v828 = vpop.permute.xlu0 %827
        %829 = vrot.lane.b32.xlu0 %v688, 127
        %v830 = vpop.permute.xlu0 %829
        %831 = vrot.lane.b32.xlu0 %v692, 127
        %v832 = vpop.permute.xlu0 %831
        %833 = vrot.lane.b32.xlu0 %v689, 127
        %v834 = vpop.permute.xlu0 %833
        %835 = vrot.lane.b32.xlu0 %v693, 127
        %v836 = vpop.permute.xlu0 %835
        %837 = vrot.lane.b32.xlu0 %v690, 127
        %v838 = vpop.permute.xlu0 %837
        %839 = vrot.lane.b32.xlu0 %v694, 127
        %v840 = vpop.permute.xlu0 %839
        %v841 = vsel %vm494, %v834, %v838
        %v842 = vsel %vm494, %v836, %v840
        %v843 = vsel %vm494, %v830, %v834
        %v844 = vsel %vm494, %v832, %v836
        %v845 = vsel %vm494, %v826, %v830
        %v846 = vsel %vm494, %v828, %v832
        %v847 = vsel %vm494, %v838, %v826
        %v848 = vsel %vm494, %v840, %v828
        %v849 = vmul.f32 %v845, %v499
        %v850 = vmul.f32 %v843, %v500
        %v851 = vmul.f32 %v841, %v501
        %v852 = vmul.f32 %v847, %v502
        %v853 = vmul.f32 %v846, %v499
        %v854 = vmul.f32 %v844, %v500
        %v855 = vmul.f32 %v842, %v501
        %v856 = vmul.f32 %v848, %v502
        %857 = vrot.lane.b32.xlu0 %v687, 113
        %v858 = vpop.permute.xlu0 %857
        %859 = vrot.lane.b32.xlu0 %v691, 113
        %v860 = vpop.permute.xlu0 %859
        %861 = vrot.lane.b32.xlu0 %v688, 113
        %v862 = vpop.permute.xlu0 %861
        %863 = vrot.lane.b32.xlu0 %v692, 113
        %v864 = vpop.permute.xlu0 %863
        %865 = vrot.lane.b32.xlu0 %v689, 113
        %v866 = vpop.permute.xlu0 %865
        %867 = vrot.lane.b32.xlu0 %v693, 113
        %v868 = vpop.permute.xlu0 %867
        %869 = vrot.lane.b32.xlu0 %v690, 113
        %v870 = vpop.permute.xlu0 %869
        %871 = vrot.lane.b32.xlu0 %v694, 113
        %v872 = vpop.permute.xlu0 %871
        %v873 = vsel %vm515, %v866, %v870
        %v874 = vsel %vm515, %v868, %v872
        %v875 = vsel %vm515, %v862, %v866
        %v876 = vsel %vm515, %v864, %v868
        %v877 = vsel %vm515, %v858, %v862
        %v878 = vsel %vm515, %v860, %v864
        %v879 = vsel %vm515, %v870, %v858
        %v880 = vsel %vm515, %v872, %v860
        %v881 = vmul.f32 %v877, %v520
        %v882 = vmul.f32 %v875, %v521
        %v883 = vmul.f32 %v873, %v522
        %v884 = vmul.f32 %v879, %v523
        %v885 = vmul.f32 %v878, %v520
        %v886 = vmul.f32 %v876, %v521
        %v887 = vmul.f32 %v874, %v522
        %v888 = vmul.f32 %v880, %v523
        %889 = vrot.lane.b32.xlu0 %v687, 112
        %v890 = vpop.permute.xlu0 %889
        %891 = vrot.lane.b32.xlu0 %v691, 112
        %v892 = vpop.permute.xlu0 %891
        %893 = vrot.lane.b32.xlu0 %v688, 112
        %v894 = vpop.permute.xlu0 %893
        %895 = vrot.lane.b32.xlu0 %v692, 112
        %v896 = vpop.permute.xlu0 %895
        %897 = vrot.lane.b32.xlu0 %v689, 112
        %v898 = vpop.permute.xlu0 %897
        %899 = vrot.lane.b32.xlu0 %v693, 112
        %v900 = vpop.permute.xlu0 %899
        %901 = vrot.lane.b32.xlu0 %v690, 112
        %v902 = vpop.permute.xlu0 %901
        %903 = vrot.lane.b32.xlu0 %v694, 112
        %v904 = vpop.permute.xlu0 %903
        %v905 = vsel %vm536, %v898, %v902
        %v906 = vsel %vm536, %v900, %v904
        %v907 = vsel %vm536, %v894, %v898
        %v908 = vsel %vm536, %v896, %v900
        %v909 = vsel %vm536, %v890, %v894
        %v910 = vsel %vm536, %v892, %v896
        %v911 = vsel %vm536, %v902, %v890
        %v912 = vsel %vm536, %v904, %v892
        %v913 = vmul.f32 %v909, %v541
        %v914 = vmul.f32 %v907, %v542
        %v915 = vmul.f32 %v905, %v543
        %v916 = vmul.f32 %v911, %v544
        %v917 = vmul.f32 %v910, %v541
        %v918 = vmul.f32 %v908, %v542
        %v919 = vmul.f32 %v906, %v543
        %v920 = vmul.f32 %v912, %v544
        %921 = vrot.lane.b32.xlu0 %v687, 111
        %v922 = vpop.permute.xlu0 %921
        %923 = vrot.lane.b32.xlu0 %v691, 111
        %v924 = vpop.permute.xlu0 %923
        %925 = vrot.lane.b32.xlu0 %v688, 111
        %v926 = vpop.permute.xlu0 %925
        %927 = vrot.lane.b32.xlu0 %v692, 111
        %v928 = vpop.permute.xlu0 %927
        %929 = vrot.lane.b32.xlu0 %v689, 111
        %v930 = vpop.permute.xlu0 %929
        %931 = vrot.lane.b32.xlu0 %v693, 111
        %v932 = vpop.permute.xlu0 %931
        %933 = vrot.lane.b32.xlu0 %v690, 111
        %v934 = vpop.permute.xlu0 %933
        %935 = vrot.lane.b32.xlu0 %v694, 111
        %v936 = vpop.permute.xlu0 %935
        %v937 = vsel %vm557, %v930, %v934
        %v938 = vsel %vm557, %v932, %v936
        %v939 = vsel %vm557, %v926, %v930
        %v940 = vsel %vm557, %v928, %v932
        %v941 = vsel %vm557, %v922, %v926
        %v942 = vsel %vm557, %v924, %v928
        %v943 = vsel %vm557, %v934, %v922
        %v944 = vsel %vm557, %v936, %v924
        %v945 = vmul.f32 %v941, %v562
        %v946 = vmul.f32 %v939, %v563
        %v947 = vmul.f32 %v937, %v564
        %v948 = vmul.f32 %v943, %v565
        %v949 = vmul.f32 %v942, %v562
        %v950 = vmul.f32 %v940, %v563
        %v951 = vmul.f32 %v938, %v564
        %v952 = vmul.f32 %v944, %v565
        %vm953 = vcmask 130048
        %v955 = vsel %vm953, %v696, 0
        %957 = vmatpush.msra.mxu0 %v917
        %958 = vmatpush.msra.mxu0 %v913
        %959 = vmatpush.msra.mxu0 %v885
        %960 = vmatpush.msra.mxu0 %v881
        %961 = vmatpush.msra.mxu0 %v853
        %962 = vmatpush.msra.mxu0 %v849
        %963 = vmatpush.msra.mxu0 %v691
        %964 = vmatpush.msra.mxu0 %v687
        %965 = vmatpush.msra.mxu0 %v821
        %966 = vmatpush.msra.mxu0 %v817
        %967 = vmatpush.msra.mxu0 %v789
        %968 = vmatpush.msra.mxu0 %v785
        %969 = vmatpush.msra.mxu0 %v757
        %970 = vmatpush.msra.mxu0 %v753
        %971 = vmatpush.msra.mxu0 %v725
        %972 = vmatpush.msra.mxu0 %v721
        %973 = vmatmul.f32.gmra.mxu0 %v695
        %v974 = vpop.f32.mrf.mxu0
        %v975 = vadd.f32 0.0, %v974
        %976 = vdwg.mxu0
        %977 = vmatpush.msra.mxu0 0.0
        %978 = vmatpush.msra.mxu0 0.0
        %979 = vmatpush.msra.mxu0 0.0
        %980 = vmatpush.msra.mxu0 0.0
        %981 = vmatpush.msra.mxu0 0.0
        %982 = vmatpush.msra.mxu0 0.0
        %983 = vmatpush.msra.mxu0 0.0
        %984 = vmatpush.msra.mxu0 0.0
        %985 = vmatpush.msra.mxu0 0.0
        %986 = vmatpush.msra.mxu0 0.0
        %987 = vmatpush.msra.mxu0 0.0
        %988 = vmatpush.msra.mxu0 0.0
        %989 = vmatpush.msra.mxu0 0.0
        %990 = vmatpush.msra.mxu0 0.0
        %991 = vmatpush.msra.mxu0 %v949
        %992 = vmatpush.msra.mxu0 %v945
        %993 = vmatmul.f32.gmra.mxu0 %v955
        %v994 = vpop.f32.mrf.mxu0
        %v995 = vadd.f32 %v975, %v994
        %996 = vdwg.mxu0
        %997 = vmatpush.msra.mxu0 %v918
        %998 = vmatpush.msra.mxu0 %v914
        %999 = vmatpush.msra.mxu0 %v886
        %1000 = vmatpush.msra.mxu0 %v882
        %1001 = vmatpush.msra.mxu0 %v854
        %1002 = vmatpush.msra.mxu0 %v850
        %1003 = vmatpush.msra.mxu0 %v692
        %1004 = vmatpush.msra.mxu0 %v688
        %1005 = vmatpush.msra.mxu0 %v822
        %1006 = vmatpush.msra.mxu0 %v818
        %1007 = vmatpush.msra.mxu0 %v790
        %1008 = vmatpush.msra.mxu0 %v786
        %1009 = vmatpush.msra.mxu0 %v758
        %1010 = vmatpush.msra.mxu0 %v754
        %1011 = vmatpush.msra.mxu0 %v726
        %1012 = vmatpush.msra.mxu0 %v722
        %1013 = vmatmul.f32.gmra.mxu0 %v695
        %v1014 = vpop.f32.mrf.mxu0
        %v1015 = vadd.f32 0.0, %v1014
        %1016 = vdwg.mxu0
        %1017 = vmatpush.msra.mxu0 0.0
        %1018 = vmatpush.msra.mxu0 0.0
        %1019 = vmatpush.msra.mxu0 0.0
        %1020 = vmatpush.msra.mxu0 0.0
        %1021 = vmatpush.msra.mxu0 0.0
        %1022 = vmatpush.msra.mxu0 0.0
        %1023 = vmatpush.msra.mxu0 0.0
        %1024 = vmatpush.msra.mxu0 0.0
        %1025 = vmatpush.msra.mxu0 0.0
        %1026 = vmatpush.msra.mxu0 0.0
        %1027 = vmatpush.msra.mxu0 0.0
        %1028 = vmatpush.msra.mxu0 0.0
        %1029 = vmatpush.msra.mxu0 0.0
        %1030 = vmatpush.msra.mxu0 0.0
        %1031 = vmatpush.msra.mxu0 %v950
        %1032 = vmatpush.msra.mxu0 %v946
        %1033 = vmatmul.f32.gmra.mxu0 %v955
        %v1034 = vpop.f32.mrf.mxu0
        %v1035 = vadd.f32 %v1015, %v1034
        %1036 = vdwg.mxu0
        %1037 = vmatpush.msra.mxu0 %v919
        %1038 = vmatpush.msra.mxu0 %v915
        %1039 = vmatpush.msra.mxu0 %v887
        %1040 = vmatpush.msra.mxu0 %v883
        %1041 = vmatpush.msra.mxu0 %v855
        %1042 = vmatpush.msra.mxu0 %v851
        %1043 = vmatpush.msra.mxu0 %v693
        %1044 = vmatpush.msra.mxu0 %v689
        %1045 = vmatpush.msra.mxu0 %v823
        %1046 = vmatpush.msra.mxu0 %v819
        %1047 = vmatpush.msra.mxu0 %v791
        %1048 = vmatpush.msra.mxu0 %v787
        %1049 = vmatpush.msra.mxu0 %v759
        %1050 = vmatpush.msra.mxu0 %v755
        %1051 = vmatpush.msra.mxu0 %v727
        %1052 = vmatpush.msra.mxu0 %v723
        %1053 = vmatmul.f32.gmra.mxu0 %v695
        %v1054 = vpop.f32.mrf.mxu0
        %v1055 = vadd.f32 0.0, %v1054
        %1056 = vdwg.mxu0
        %1057 = vmatpush.msra.mxu0 0.0
        %1058 = vmatpush.msra.mxu0 0.0
        %1059 = vmatpush.msra.mxu0 0.0
        %1060 = vmatpush.msra.mxu0 0.0
        %1061 = vmatpush.msra.mxu0 0.0
        %1062 = vmatpush.msra.mxu0 0.0
        %1063 = vmatpush.msra.mxu0 0.0
        %1064 = vmatpush.msra.mxu0 0.0
        %1065 = vmatpush.msra.mxu0 0.0
        %1066 = vmatpush.msra.mxu0 0.0
        %1067 = vmatpush.msra.mxu0 0.0
        %1068 = vmatpush.msra.mxu0 0.0
        %1069 = vmatpush.msra.mxu0 0.0
        %1070 = vmatpush.msra.mxu0 0.0
        %1071 = vmatpush.msra.mxu0 %v951
        %1072 = vmatpush.msra.mxu0 %v947
        %1073 = vmatmul.f32.gmra.mxu0 %v955
        %v1074 = vpop.f32.mrf.mxu0
        %v1075 = vadd.f32 %v1055, %v1074
        %1076 = vdwg.mxu0
        %1077 = vmatpush.msra.mxu0 %v920
        %1078 = vmatpush.msra.mxu0 %v916
        %1079 = vmatpush.msra.mxu0 %v888
        %1080 = vmatpush.msra.mxu0 %v884
        %1081 = vmatpush.msra.mxu0 %v856
        %1082 = vmatpush.msra.mxu0 %v852
        %1083 = vmatpush.msra.mxu0 %v694
        %1084 = vmatpush.msra.mxu0 %v690
        %1085 = vmatpush.msra.mxu0 %v824
        %1086 = vmatpush.msra.mxu0 %v820
        %1087 = vmatpush.msra.mxu0 %v792
        %1088 = vmatpush.msra.mxu0 %v788
        %1089 = vmatpush.msra.mxu0 %v760
        %1090 = vmatpush.msra.mxu0 %v756
        %1091 = vmatpush.msra.mxu0 %v728
        %1092 = vmatpush.msra.mxu0 %v724
        %1093 = vmatmul.f32.gmra.mxu0 %v695
        %v1094 = vpop.f32.mrf.mxu0
        %v1095 = vadd.f32 0.0, %v1094
        %1096 = vdwg.mxu0
        %1097 = vmatpush.msra.mxu0 0.0
        %1098 = vmatpush.msra.mxu0 0.0
        %1099 = vmatpush.msra.mxu0 0.0
        %1100 = vmatpush.msra.mxu0 0.0
        %1101 = vmatpush.msra.mxu0 0.0
        %1102 = vmatpush.msra.mxu0 0.0
        %1103 = vmatpush.msra.mxu0 0.0
        %1104 = vmatpush.msra.mxu0 0.0
        %1105 = vmatpush.msra.mxu0 0.0
        %1106 = vmatpush.msra.mxu0 0.0
        %1107 = vmatpush.msra.mxu0 0.0
        %1108 = vmatpush.msra.mxu0 0.0
        %1109 = vmatpush.msra.mxu0 0.0
        %1110 = vmatpush.msra.mxu0 0.0
        %1111 = vmatpush.msra.mxu0 %v952
        %1112 = vmatpush.msra.mxu0 %v948
        %1113 = vmatmul.f32.gmra.mxu0 %v955
        %v1114 = vpop.f32.mrf.mxu0
        %v1115 = vadd.f32 %v1095, %v1114
        %1116 = vdwg.mxu0
        %v1117 = vld [vmem:[%s4] sm:$0xff]
        %v1118 = vld [vmem:[%s4 + $0x8] sm:$0xff]
        %v1119 = vld [vmem:[%s4 + $0x10] sm:$0xff]
        %v1120 = vld [vmem:[%s4 + $0x18] sm:$0xff]
        %v1121 = vld [vmem:[%s4 + $0x20] sm:$0xff]
        %v1122 = vld [vmem:[%s4 + $0x28] sm:$0xff]
        %v1123 = vld [vmem:[%s4 + $0x30] sm:$0xff]
        %v1124 = vld [vmem:[%s4 + $0x38] sm:$0xff]
        %v1125 = vld [vmem:[%s4 + $0x40] sm:$0xff]
        %v1126 = vld [vmem:[%s4 + $0x48] sm:$0xff]
        %v1127 = vld [vmem:[%s4 + $0x50] sm:$0xff]
        %v1128 = vld [vmem:[%s4 + $0x58] sm:$0xff]
        %v1129 = vld [vmem:[%s4 + $0x60] sm:$0xff]
        %v1130 = vld [vmem:[%s4 + $0x68] sm:$0xff]
        %v1131 = vld [vmem:[%s4 + $0x70] sm:$0xff]
        %v1132 = vld [vmem:[%s4 + $0x78] sm:$0xff]
        %v1133 = vld [vmem:[%s4 + $0x80] sm:$0xff]
        %v1134 = vld [vmem:[%s4 + $0x88] sm:$0xff]
        %v1135 = vld [vmem:[%s4 + $0x90] sm:$0xff]
        %v1136 = vld [vmem:[%s4 + $0x98] sm:$0xff]
        %v1137 = vld [vmem:[%s4 + $0xa0] sm:$0xff]
        %v1138 = vld [vmem:[%s4 + $0xa8] sm:$0xff]
        %v1139 = vld [vmem:[%s4 + $0xb0] sm:$0xff]
        %v1140 = vld [vmem:[%s4 + $0xb8] sm:$0xff]
        %v1141 = vld [vmem:[%s4 + $0xc0] sm:$0xff]
        %v1142 = vld [vmem:[%s4 + $0xc8] sm:$0xff]
        %v1143 = vld [vmem:[%s4 + $0xd0] sm:$0xff]
        %v1144 = vld [vmem:[%s4 + $0xd8] sm:$0xff]
        %v1145 = vld [vmem:[%s4 + $0xe0] sm:$0xff]
        %v1146 = vld [vmem:[%s4 + $0xe8] sm:$0xff]
        %v1147 = vld [vmem:[%s4 + $0xf0] sm:$0xff]
        %v1148 = vld [vmem:[%s4 + $0xf8] sm:$0xff]
        %v1149 = vld [vmem:[%s4 + $0x100] sm:$0xff]
        %v1150 = vld [vmem:[%s4 + $0x108] sm:$0xff]
        %v1151 = vld [vmem:[%s4 + $0x110] sm:$0xff]
        %v1152 = vld [vmem:[%s4 + $0x118] sm:$0xff]
        %v1153 = vld [vmem:[%s4 + $0x120] sm:$0xff]
        %v1154 = vld [vmem:[%s4 + $0x128] sm:$0xff]
        %v1155 = vld [vmem:[%s4 + $0x130] sm:$0xff]
        %v1156 = vld [vmem:[%s4 + $0x138] sm:$0xff]
        %v1157 = vld [vmem:[%s4 + $0x140] sm:$0xff]
        %v1158 = vld [vmem:[%s4 + $0x148] sm:$0xff]
        %v1159 = vld [vmem:[%s4 + $0x150] sm:$0xff]
        %v1160 = vld [vmem:[%s4 + $0x158] sm:$0xff]
        %v1161 = vld [vmem:[%s4 + $0x160] sm:$0xff]
        %v1162 = vld [vmem:[%s4 + $0x168] sm:$0xff]
        %v1163 = vld [vmem:[%s4 + $0x170] sm:$0xff]
        %v1164 = vld [vmem:[%s4 + $0x178] sm:$0xff]
        %v1165 = vld [vmem:[%s4 + $0x180] sm:$0xff]
        %v1166 = vld [vmem:[%s4 + $0x188] sm:$0xff]
        %v1167 = vld [vmem:[%s4 + $0x190] sm:$0xff]
        %v1168 = vld [vmem:[%s4 + $0x198] sm:$0xff]
        %v1169 = vld [vmem:[%s4 + $0x1a0] sm:$0xff]
        %v1170 = vld [vmem:[%s4 + $0x1a8] sm:$0xff]
        %v1171 = vld [vmem:[%s4 + $0x1b0] sm:$0xff]
        %v1172 = vld [vmem:[%s4 + $0x1b8] sm:$0xff]
        %v1173 = vld [vmem:[%s4 + $0x1c0] sm:$0xff]
        %v1174 = vld [vmem:[%s4 + $0x1c8] sm:$0xff]
        %v1175 = vld [vmem:[%s4 + $0x1d0] sm:$0xff]
        %v1176 = vld [vmem:[%s4 + $0x1d8] sm:$0xff]
        %v1177 = vld [vmem:[%s4 + $0x1e0] sm:$0xff]
        %v1178 = vld [vmem:[%s4 + $0x1e8] sm:$0xff]
        %v1179 = vld [vmem:[%s4 + $0x1f0] sm:$0xff]
        %v1180 = vld [vmem:[%s4 + $0x1f8] sm:$0xff]
        %1181 = vmatpush.msra.mxu0 %v1132
        %1182 = vmatpush.msra.mxu0 %v1131
        %1183 = vmatpush.msra.mxu0 %v1130
        %1184 = vmatpush.msra.mxu0 %v1129
        %1185 = vmatpush.msra.mxu0 %v1128
        %1186 = vmatpush.msra.mxu0 %v1127
        %1187 = vmatpush.msra.mxu0 %v1126
        %1188 = vmatpush.msra.mxu0 %v1125
        %1189 = vmatpush.msra.mxu0 %v1124
        %1190 = vmatpush.msra.mxu0 %v1123
        %1191 = vmatpush.msra.mxu0 %v1122
        %1192 = vmatpush.msra.mxu0 %v1121
        %1193 = vmatpush.msra.mxu0 %v1120
        %1194 = vmatpush.msra.mxu0 %v1119
        %1195 = vmatpush.msra.mxu0 %v1118
        %1196 = vmatpush.msra.mxu0 %v1117
        %1197 = vmatmul.f32.gmra.mxu0 %v995
        %v1198 = vpop.f32.mrf.mxu0
        %v1199 = vadd.f32 0.0, %v1198
        %1200 = vdwg.mxu0
        %1201 = vmatpush.msra.mxu0 %v1148
        %1202 = vmatpush.msra.mxu0 %v1147
        %1203 = vmatpush.msra.mxu0 %v1146
        %1204 = vmatpush.msra.mxu0 %v1145
        %1205 = vmatpush.msra.mxu0 %v1144
        %1206 = vmatpush.msra.mxu0 %v1143
        %1207 = vmatpush.msra.mxu0 %v1142
        %1208 = vmatpush.msra.mxu0 %v1141
        %1209 = vmatpush.msra.mxu0 %v1140
        %1210 = vmatpush.msra.mxu0 %v1139
        %1211 = vmatpush.msra.mxu0 %v1138
        %1212 = vmatpush.msra.mxu0 %v1137
        %1213 = vmatpush.msra.mxu0 %v1136
        %1214 = vmatpush.msra.mxu0 %v1135
        %1215 = vmatpush.msra.mxu0 %v1134
        %1216 = vmatpush.msra.mxu0 %v1133
        %1217 = vmatmul.f32.gmra.mxu0 %v1035
        %v1218 = vpop.f32.mrf.mxu0
        %v1219 = vadd.f32 %v1199, %v1218
        %1220 = vdwg.mxu0
        %1221 = vmatpush.msra.mxu0 %v1164
        %1222 = vmatpush.msra.mxu0 %v1163
        %1223 = vmatpush.msra.mxu0 %v1162
        %1224 = vmatpush.msra.mxu0 %v1161
        %1225 = vmatpush.msra.mxu0 %v1160
        %1226 = vmatpush.msra.mxu0 %v1159
        %1227 = vmatpush.msra.mxu0 %v1158
        %1228 = vmatpush.msra.mxu0 %v1157
        %1229 = vmatpush.msra.mxu0 %v1156
        %1230 = vmatpush.msra.mxu0 %v1155
        %1231 = vmatpush.msra.mxu0 %v1154
        %1232 = vmatpush.msra.mxu0 %v1153
        %1233 = vmatpush.msra.mxu0 %v1152
        %1234 = vmatpush.msra.mxu0 %v1151
        %1235 = vmatpush.msra.mxu0 %v1150
        %1236 = vmatpush.msra.mxu0 %v1149
        %1237 = vmatmul.f32.gmra.mxu0 %v1075
        %v1238 = vpop.f32.mrf.mxu0
        %v1239 = vadd.f32 %v1219, %v1238
        %1240 = vdwg.mxu0
        %1241 = vmatpush.msra.mxu0 %v1180
        %1242 = vmatpush.msra.mxu0 %v1179
        %1243 = vmatpush.msra.mxu0 %v1178
        %1244 = vmatpush.msra.mxu0 %v1177
        %1245 = vmatpush.msra.mxu0 %v1176
        %1246 = vmatpush.msra.mxu0 %v1175
        %1247 = vmatpush.msra.mxu0 %v1174
        %1248 = vmatpush.msra.mxu0 %v1173
        %1249 = vmatpush.msra.mxu0 %v1172
        %1250 = vmatpush.msra.mxu0 %v1171
        %1251 = vmatpush.msra.mxu0 %v1170
        %1252 = vmatpush.msra.mxu0 %v1169
        %1253 = vmatpush.msra.mxu0 %v1168
        %1254 = vmatpush.msra.mxu0 %v1167
        %1255 = vmatpush.msra.mxu0 %v1166
        %1256 = vmatpush.msra.mxu0 %v1165
        %1257 = vmatmul.f32.gmra.mxu0 %v1115
        %v1258 = vpop.f32.mrf.mxu0
        %v1259 = vadd.f32 %v1239, %v1258
        %1260 = vdwg.mxu0
        %v1261 = vld [vmem:[%s6] sm:$0x3]
        %v1262 = vld [vmem:[%s7] sm:$0x3]
        %1264 = vset.pattern.permute.xlu0 0
        %1265 = vperm.xlu0 %1264, %v1262
        %v1266 = vpop.permute.xlu0 %1265
        %vm1268 = vcmask 64512
        %v1270 = vsel %vm1268, %v1261, 0
        %1272 = vmatpush.msra.mxu0 0.0
        %1273 = vmatpush.msra.mxu0 0.0
        %1274 = vmatpush.msra.mxu0 0.0
        %1275 = vmatpush.msra.mxu0 0.0
        %1276 = vmatpush.msra.mxu0 0.0
        %1277 = vmatpush.msra.mxu0 0.0
        %1278 = vmatpush.msra.mxu0 0.0
        %1279 = vmatpush.msra.mxu0 0.0
        %1280 = vmatpush.msra.mxu0 0.0
        %1281 = vmatpush.msra.mxu0 0.0
        %1282 = vmatpush.msra.mxu0 0.0
        %1283 = vmatpush.msra.mxu0 0.0
        %1284 = vmatpush.msra.mxu0 0.0
        %1285 = vmatpush.msra.mxu0 0.0
        %1286 = vmatpush.msra.mxu0 0.0
        %1287 = vmatpush.msra.mxu0 %v1259
        %1288 = vmatmul.f32.gmra.mxu0 %v1270
        %v1289 = vpop.f32.mrf.mxu0
        %v1290 = vadd.f32 %v1266, %v1289
        %1291 = vdwg.mxu0
        %v1292 = vmax.f32 %v1290, 0.0
        %v1293 = vld [vmem:[%s8] sm:$0xff]
        %v1294 = vld [vmem:[%s9] sm:$0xff]
        %1296 = vset.pattern.permute.xlu0 0
        %1297 = vperm.xlu0 %1296, %v1294
        %v1298 = vpop.permute.xlu0 %1297
        %vm1300 = vcmask 15360
        %v1302 = vsel %vm1300, %v1293, 0
        %vm1304 = vcmask 1041408
        %v1306 = vsel %vm1304, %v1292, 0
        %1308 = vmatpush.msra.mxu0 0.0
        %1309 = vmatpush.msra.mxu0 0.0
        %1310 = vmatpush.msra.mxu0 0.0
        %1311 = vmatpush.msra.mxu0 0.0
        %1312 = vmatpush.msra.mxu0 0.0
        %1313 = vmatpush.msra.mxu0 0.0
        %1314 = vmatpush.msra.mxu0 0.0
        %1315 = vmatpush.msra.mxu0 0.0
        %1316 = vmatpush.msra.mxu0 0.0
        %1317 = vmatpush.msra.mxu0 0.0
        %1318 = vmatpush.msra.mxu0 0.0
        %1319 = vmatpush.msra.mxu0 0.0
        %1320 = vmatpush.msra.mxu0 0.0
        %1321 = vmatpush.msra.mxu0 0.0
        %1322 = vmatpush.msra.mxu0 0.0
        %1323 = vmatpush.msra.mxu0 %v1306
        %1324 = vmatmul.f32.gmra.mxu0 %v1302
        %v1325 = vpop.f32.mrf.mxu0
        %v1326 = vadd.f32 %v1298, %v1325
        %1327 = vdwg.mxu0
        %v1328 = vxor.u32 %v1326, 2147483648
        %v1329 = vmul.f32 %v1328, 1.442695
        %v1330 = vpow.pop %v1329
        %v1331 = vadd.f32 %v1330, 1.0
        %v1332 = vrcp.pop %v1331
        %v1333 = vmul.f32 %v1331, %v1332
        %v1334 = vsub.f32 1.0, %v1333
        %v1335 = vmul.f32 %v1332, %v1334
        %v1336 = vadd.f32 %v1332, %v1335
        %vm1337 = vweird.f32 %v1331
        %vm1338 = vweird.f32 %v1332
        %vm1339 = vmor %vm1337, %vm1338
        %v1340 = vsel %vm1339, %v1332, %v1336
        %v1341 = vand.u32 2147483647, %v1331
        %vm1342 = vcmp.eq.f32.partialorder %v1341, 8.507059e+37
        %v1343 = vand.u32 %v1331, 2147483648
        %v1344 = vor.u32 1.1754944e-38, %v1343
        %v1345 = vsel %vm1342, %v1344, %v1340
        %v1346 = vmul.f32 1.0, %v1345
        %v1347 = vld [vmem:[%s5] sm:$0xff]
        %1349 = vst [vmem:[#allocation1] ss:$4 sm:$0xff] %v1347
        %v1350 = vld.sshfl [vmem:[#allocation1] sm:$0xff pattern:$0x73625140]
        %v1351 = vld.sshfl [vmem:[#allocation1 + $0x8] sm:$0xff pattern:$0x73625140]
        %v1352 = vld.sshfl [vmem:[#allocation1 + $0x10] sm:$0xff pattern:$0x73625140]
        %v1353 = vld.sshfl [vmem:[#allocation1 + $0x18] sm:$0xff pattern:$0x73625140]
        %v1355 = vsel %vm1300, %v1346, 0
        %v1357 = vsel %vm1304, %v1350, 0
        %v1359 = vsel %vm1304, %v1351, 0
        %v1361 = vsel %vm1304, %v1352, 0
        %v1363 = vsel %vm1304, %v1353, 0
        %1365 = vmatpush.msra.mxu0 0.0
        %1366 = vmatpush.msra.mxu0 0.0
        %1367 = vmatpush.msra.mxu0 0.0
        %1368 = vmatpush.msra.mxu0 0.0
        %1369 = vmatpush.msra.mxu0 0.0
        %1370 = vmatpush.msra.mxu0 0.0
        %1371 = vmatpush.msra.mxu0 0.0
        %1372 = vmatpush.msra.mxu0 0.0
        %1373 = vmatpush.msra.mxu0 0.0
        %1374 = vmatpush.msra.mxu0 0.0
        %1375 = vmatpush.msra.mxu0 0.0
        %1376 = vmatpush.msra.mxu0 0.0
        %1377 = vmatpush.msra.mxu0 0.0
        %1378 = vmatpush.msra.mxu0 0.0
        %1379 = vmatpush.msra.mxu0 0.0
        %1380 = vmatpush.msra.mxu0 %v1357
        %1381 = vmatmul.f32.gmra.mxu0 %v1355
        %v1382 = vpop.f32.mrf.mxu0
        %v1383 = vadd.f32 0.0, %v1382
        %1384 = vdwg.mxu0
        %1385 = vmatpush.msra.mxu0 0.0
        %1386 = vmatpush.msra.mxu0 0.0
        %1387 = vmatpush.msra.mxu0 0.0
        %1388 = vmatpush.msra.mxu0 0.0
        %1389 = vmatpush.msra.mxu0 0.0
        %1390 = vmatpush.msra.mxu0 0.0
        %1391 = vmatpush.msra.mxu0 0.0
        %1392 = vmatpush.msra.mxu0 0.0
        %1393 = vmatpush.msra.mxu0 0.0
        %1394 = vmatpush.msra.mxu0 0.0
        %1395 = vmatpush.msra.mxu0 0.0
        %1396 = vmatpush.msra.mxu0 0.0
        %1397 = vmatpush.msra.mxu0 0.0
        %1398 = vmatpush.msra.mxu0 0.0
        %1399 = vmatpush.msra.mxu0 0.0
        %1400 = vmatpush.msra.mxu0 %v1359
        %1401 = vmatmul.f32.gmra.mxu0 %v1355
        %v1402 = vpop.f32.mrf.mxu0
        %v1403 = vadd.f32 0.0, %v1402
        %1404 = vdwg.mxu0
        %1405 = vmatpush.msra.mxu0 0.0
        %1406 = vmatpush.msra.mxu0 0.0
        %1407 = vmatpush.msra.mxu0 0.0
        %1408 = vmatpush.msra.mxu0 0.0
        %1409 = vmatpush.msra.mxu0 0.0
        %1410 = vmatpush.msra.mxu0 0.0
        %1411 = vmatpush.msra.mxu0 0.0
        %1412 = vmatpush.msra.mxu0 0.0
        %1413 = vmatpush.msra.mxu0 0.0
        %1414 = vmatpush.msra.mxu0 0.0
        %1415 = vmatpush.msra.mxu0 0.0
        %1416 = vmatpush.msra.mxu0 0.0
        %1417 = vmatpush.msra.mxu0 0.0
        %1418 = vmatpush.msra.mxu0 0.0
        %1419 = vmatpush.msra.mxu0 0.0
        %1420 = vmatpush.msra.mxu0 %v1361
        %1421 = vmatmul.f32.gmra.mxu0 %v1355
        %v1422 = vpop.f32.mrf.mxu0
        %v1423 = vadd.f32 0.0, %v1422
        %1424 = vdwg.mxu0
        %1425 = vmatpush.msra.mxu0 0.0
        %1426 = vmatpush.msra.mxu0 0.0
        %1427 = vmatpush.msra.mxu0 0.0
        %1428 = vmatpush.msra.mxu0 0.0
        %1429 = vmatpush.msra.mxu0 0.0
        %1430 = vmatpush.msra.mxu0 0.0
        %1431 = vmatpush.msra.mxu0 0.0
        %1432 = vmatpush.msra.mxu0 0.0
        %1433 = vmatpush.msra.mxu0 0.0
        %1434 = vmatpush.msra.mxu0 0.0
        %1435 = vmatpush.msra.mxu0 0.0
        %1436 = vmatpush.msra.mxu0 0.0
        %1437 = vmatpush.msra.mxu0 0.0
        %1438 = vmatpush.msra.mxu0 0.0
        %1439 = vmatpush.msra.mxu0 0.0
        %1440 = vmatpush.msra.mxu0 %v1363
        %1441 = vmatmul.f32.gmra.mxu0 %v1355
        %v1442 = vpop.f32.mrf.mxu0
        %v1443 = vadd.f32 0.0, %v1442
        %1444 = vdwg.mxu0
        %v1445 = vmul.f32 %v995, %v1383
        %v1446 = vmul.f32 %v1035, %v1403
        %v1447 = vmul.f32 %v1075, %v1423
        %v1448 = vmul.f32 %v1115, %v1443
        %v1449 = vadd.f32 %v1445, %v386
        %v1450 = vadd.f32 %v1446, %v387
        %v1451 = vadd.f32 %v1447, %v388
        %v1452 = vadd.f32 %v1448, %v389
        %1453 = vst [vmem:[%s380] sm:$0xff] %v1449
        %1454 = vst [vmem:[%s380 + $0x8] sm:$0xff] %v1450
        %1455 = vst [vmem:[%s380 + $0x10] sm:$0xff] %v1451
        %1456 = vst [vmem:[%s380 + $0x18] sm:$0xff] %v1452
        %s1457 = sand.u32 %s270, 1
        %s1458 = scalar_lea.sflag [#allocation4], %s1457
        %s1459 = sand.u32 %s270, 1
        %s1460 = smul.addr %s1459, 32
        %s1461 = scalar_lea.vmem [#allocation3], %s1460
        // Predicated region
        $region65: #{tpu_custom_call.1} parent=63 // pred_check
          %p1462 = pneg %p280
        $region66: #{tpu_custom_call.1} parent=63 // pred_check_branch
          %1464 = sbr.rel (%p1462) target = $region68
        $region67: #{tpu_custom_call.1} parent=63 // pred_region
          %1466 = vsyncadd %s1458, 0
          %s1467 = smul.addr %s26, 4
          %s1468 = smul.addr %s1467, 8
          %s1469 = scalar_lea.hbm %s11, %s1468
          %s1471 = sshll.u32 %s1461, 4
          %s1472 = int_to_ptr.vmem [resolvable:$true] %s1471
          %s1473 = sshll.u32 %s1469, 4
          %s1474 = int_to_ptr.hbm [resolvable:$true] %s1473
          %1476 = dma.vmem_to_hbm [thread:$0]  %s1472, 512, %s1474, %s1458
        $region68: #{tpu_custom_call.1} parent=63 // pred_fallthru
          _
      $region64: #{tpu_custom_call.1} parent=5 // pred_fallthru
        _
      %p1477 = scmp.le.s32.totalorder 2, %s21
      // Predicated region
      $region69: #{tpu_custom_call.1} parent=5 // pred_check
        %p1478 = pneg %p1477
      $region70: #{tpu_custom_call.1} parent=5 // pred_check_branch
        %1480 = sbr.rel (%p1478) target = $region72
      $region71: #{tpu_custom_call.1} parent=5 // pred_region
        %s1481 = ssub.s32 %s21, 2
        // Predicated region
        $region73: #{tpu_custom_call.1} parent=71 // pred_check
          %p1482 = pneg %p286
        $region74: #{tpu_custom_call.1} parent=71 // pred_check_branch
          %1484 = sbr.rel (%p1482) target = $region76
        $region75: #{tpu_custom_call.1} parent=71 // pred_region
          %s1485 = sand.u32 %s271, 1
          %s1486 = scalar_lea.sflag [#allocation4], %s1485
          %s1487 = sand.u32 %s271, 1
          %s1488 = smul.addr %s1487, 32
          %s1489 = scalar_lea.vmem [#allocation3], %s1488
          %1491 = dma.done %s1486, 512
        $region76: #{tpu_custom_call.1} parent=71 // pred_fallthru
          _
      $region72: #{tpu_custom_call.1} parent=5 // pred_fallthru
        _
    $region6: #{tpu_custom_call.1} parent=1 // loop_footer
      %s25 = sadd.s32 1, %s21
    $region7: #{tpu_custom_call.1} parent=1 // loop_footer_branch
      %20 = sbr.rel target = $region3
    $region8: #{tpu_custom_call.1} parent=1 // loop_exit
      _
    %1492 = vsyncpa [#allocation4], 1
    %s1493 = scalar_lea.sflag [#allocation4], 1
    %1494 = vsyncpa %s1493, 1

</llo_original>
